<compile_context>
chip_gen: v5e
topology: v5e:2x2
jax: 0.10.0
libtpu: 0.0.40
codegen_flags: <defaults>
</compile_context>

<pallas_src>
import jax
import jax.numpy as jnp
from jax.experimental import pallas as pl
from jax.experimental.pallas import tpu as pltpu

N_ACTIONS = 1
N_OBS = 3
NETWORK_SIZE = 256
LEAKY_SLOPE = 0.01   # F.leaky_relu default negative_slope
MAX_TM = 1024        # max batch columns per grid step (sweepable: 512/1024/2048)


def _leaky_relu(x):
    # max(x, a*x) == leaky_relu(x) for 0 < a < 1: 2 VALU ops/elem vs 3 for where().
    return jnp.maximum(x, LEAKY_SLOPE * x)


def actor_kernel(x_ref, w1_ref, b1_ref, w2_ref, b2_ref, w3_ref, b3_ref, out_ref):
    """Feature-major: x [3, tm], activations [256, tm], output [1, tm] (lane-dense)."""
    x = x_ref[...]        # [3, tm]   f32
    w1 = w1_ref[...]      # [256, 3]  f32 (PyTorch [out, in] layout)

    # ---- Layer 1: K=3 contraction as a VPU broadcast-MAC (no MXU push) ----
    h1 = (w1[:, 0:1] * x[0:1, :]
          + w1[:, 1:2] * x[1:2, :]
          + w1[:, 2:3] * x[2:3, :]
          + b1_ref[...])                                             # [256, tm]
    h1 = _leaky_relu(h1)

    # ---- Layer 2: the only real MXU matmul; bf16 inputs, f32 accumulation ----
    h2 = jnp.dot(w2_ref[...], h1.astype(w2_ref.dtype),
                 preferred_element_type=jnp.float32) + b2_ref[...]   # [256, tm]
    h2 = _leaky_relu(h2)

    # ---- Layer 3: N_ACTIONS=1 contraction as mul + sublane reduce ----
    # Result is already the lane-dense [1, tm] row this layout targets.
    mu = jnp.sum(h2 * w3_ref[...], axis=0, keepdims=True) + b3_ref[...]  # [1, tm]
    out_ref[...] = mu.astype(out_ref.dtype)


def _choose_tile(batch):
    """Batch-tile (lane) width per grid step."""
    if batch <= 256:
        # Single full-extent block: satisfies the (8,128) rule via "equal to the
        # full array dim", and the whole problem fits one step anyway.
        return batch
    # Lane-dense tiles must be multiples of 128.  Aim for >= 2 grid steps so the
    # "parallel" batch axis can shard across both v7x TensorCores, capped at
    # MAX_TM to keep per-step overhead <~15% without growing VMEM needlessly.
    half = (batch // 2) // 128 * 128
    return max(128, min(MAX_TM, half))


def actor_forward(state, params):
    """state: [B, N_OBS] float32 -> mu: [B, N_ACTIONS] float32."""
    B = state.shape[0]
    w1, b1, w2, b2, w3, b3 = (params["w1"], params["b1"], params["w2"],
                              params["b2"], params["w3"], params["b3"])

    tm = _choose_tile(B)
    grid = (pl.cdiv(B, tm),)

    # Feature-major input [N_OBS, B]; B*12 bytes, negligible wrapper cost.
    state_t = state.T

    flops = 2 * B * (N_OBS * NETWORK_SIZE + NETWORK_SIZE * NETWORK_SIZE
                     + NETWORK_SIZE * N_ACTIONS)
    bytes_accessed = (state.size * 4 + B * N_ACTIONS * 4
                      + w1.size * 4 + b1.size * 4
                      + w2.size * 2 + b2.size * 4
                      + w3.size * 4 + b3.size * 4)

    mu_t = pl.pallas_call(
        actor_kernel,
        out_shape=jax.ShapeDtypeStruct((N_ACTIONS, B), jnp.float32),
        grid_spec=pltpu.PrefetchScalarGridSpec(
            num_scalar_prefetch=0,
            grid=grid,
            in_specs=[
                # x: tiled over the batch (lane) axis
                pl.BlockSpec((N_OBS, tm), lambda i: (0, i)),
                # weights / biases: single full blocks, VMEM-resident across steps
                pl.BlockSpec((NETWORK_SIZE, N_OBS), lambda i: (0, 0)),          # w1 f32
                pl.BlockSpec((NETWORK_SIZE, 1), lambda i: (0, 0)),              # b1 f32
                pl.BlockSpec((NETWORK_SIZE, NETWORK_SIZE), lambda i: (0, 0)),   # w2 bf16
                pl.BlockSpec((NETWORK_SIZE, 1), lambda i: (0, 0)),              # b2 f32
                pl.BlockSpec((NETWORK_SIZE, N_ACTIONS), lambda i: (0, 0)),      # w3 f32
                pl.BlockSpec((N_ACTIONS, 1), lambda i: (0, 0)),                 # b3 f32
            ],
            out_specs=pl.BlockSpec((N_ACTIONS, tm), lambda i: (0, i)),
        ),
        compiler_params=pltpu.CompilerParams(
            dimension_semantics=("parallel",),   # shards batch across TCs on v7x
        ),
        cost_estimate=pl.CostEstimate(
            flops=flops, transcendentals=0, bytes_accessed=bytes_accessed),
    )(state_t, w1, b1, w2, b2, w3, b3)

    return mu_t.T   # back to [B, N_ACTIONS]


def init_params(key):
    """PyTorch nn.Linear default init (U[-1/sqrt(fan_in), +1/sqrt(fan_in)]).

    Stored feature-major for the kernel: W as [out, in] (PyTorch layout),
    b as [out, 1]; w3 is kept as a [256, 1] column for the mul+reduce layer.
    """
    def linear(k, fan_in, fan_out):
        kw, kb = jax.random.split(k)
        bound = 1.0 / jnp.sqrt(fan_in)
        w = jax.random.uniform(kw, (fan_out, fan_in), jnp.float32, -bound, bound)
        b = jax.random.uniform(kb, (fan_out, 1), jnp.float32, -bound, bound)
        return w, b

    k1, k2, k3 = jax.random.split(key, 3)
    w1, b1 = linear(k1, N_OBS, NETWORK_SIZE)          # [256, 3], [256, 1]
    w2, b2 = linear(k2, NETWORK_SIZE, NETWORK_SIZE)   # [256, 256], [256, 1]
    w3r, b3 = linear(k3, NETWORK_SIZE, N_ACTIONS)     # [1, 256], [1, 1]
    # w2 dominates HBM traffic and feeds the MXU -> bf16; accumulation stays f32.
    w2 = w2.astype(jnp.bfloat16)
    w3 = w3r.T                                        # [256, 1] f32 column
    return {"w1": w1, "b1": b1, "w2": w2, "b2": b2, "w3": w3, "b3": b3}


def actor_forward_ref(state, params):
    """Pure-JAX reference matching the kernel's arithmetic (bf16 layer-2 inputs)."""
    x = state.T                                                       # [3, B]
    h1 = _leaky_relu(params["w1"] @ x + params["b1"])
    h2 = _leaky_relu(jnp.dot(params["w2"], h1.astype(params["w2"].dtype),
                             preferred_element_type=jnp.float32) + params["b2"])
    mu = jnp.sum(h2 * params["w3"], axis=0, keepdims=True) + params["b3"]
    return mu.T


if __name__ == "__main__":
    key = jax.random.PRNGKey(0)
    kp, kx, kx2 = jax.random.split(key, 3)

    params = init_params(kp)

    # Primary small check: single grid step, full-extent (B=8) tile.
    batch = 8
    state = jax.random.normal(kx, (batch, N_OBS), dtype=jnp.float32)
    mu = jax.block_until_ready(actor_forward(state, params))
    ref = actor_forward_ref(state, params)
    assert mu.shape == (batch, N_ACTIONS)
    # bf16 layer-2 inputs -> tolerance loosened vs pure-f32 (intentional tradeoff).
    assert jnp.allclose(mu, ref, atol=2e-3, rtol=2e-3), (
        f"max abs err {jnp.max(jnp.abs(mu - ref))}")

    # Secondary check exercising the tiled path (tm=128, 3 grid steps).
    batch2 = 384
    state2 = jax.random.normal(kx2, (batch2, N_OBS), dtype=jnp.float32)
    mu2 = jax.block_until_ready(actor_forward(state2, params))
    ref2 = actor_forward_ref(state2, params)
    assert mu2.shape == (batch2, N_ACTIONS)
    assert jnp.allclose(mu2, ref2, atol=2e-3, rtol=2e-3), (
        f"max abs err {jnp.max(jnp.abs(mu2 - ref2))}")

    print("KERNEL_OK")
</pallas_src>

<mosaic_0001>
module attributes {stable_mosaic.version = 11 : i64} {
  func.func @actor_kernel(%arg0: i32, %arg1: memref<3x8xf32, #tpu.memory_space<vmem>>, %arg2: memref<256x3xf32, #tpu.memory_space<vmem>>, %arg3: memref<256x1xf32, #tpu.memory_space<vmem>>, %arg4: memref<256x256xbf16, #tpu.memory_space<vmem>>, %arg5: memref<256x1xf32, #tpu.memory_space<vmem>>, %arg6: memref<256x1xf32, #tpu.memory_space<vmem>>, %arg7: memref<1x1xf32, #tpu.memory_space<vmem>>, %arg8: memref<1x8xf32, #tpu.memory_space<vmem>>) attributes {dimension_semantics = [#tpu.dimension_semantics<parallel>], iteration_bounds = array<i64: 1>, scalar_prefetch = 0 : i64, scratch_operands = 0 : i64, tpu.core_type = #tpu.core_type<tc>, window_params = [{transform_indices = @transform_0, window_bounds = array<i64: 3, 8>}, {pipeline_mode = #tpu.pipeline_mode<synchronous>, transform_indices = @transform_1, window_bounds = array<i64: 256, 3>}, {pipeline_mode = #tpu.pipeline_mode<synchronous>, transform_indices = @transform_2, window_bounds = array<i64: 256, 1>}, {pipeline_mode = #tpu.pipeline_mode<synchronous>, transform_indices = @transform_3, window_bounds = array<i64: 256, 256>}, {pipeline_mode = #tpu.pipeline_mode<synchronous>, transform_indices = @transform_4, window_bounds = array<i64: 256, 1>}, {pipeline_mode = #tpu.pipeline_mode<synchronous>, transform_indices = @transform_5, window_bounds = array<i64: 256, 1>}, {pipeline_mode = #tpu.pipeline_mode<synchronous>, transform_indices = @transform_6, window_bounds = array<i64: 1, 1>}, {transform_indices = @transform_7, window_bounds = array<i64: 1, 8>}]} {
    %c0 = arith.constant 0 : index
    %c0_0 = arith.constant 0 : index
    %0 = vector.load %arg1[%c0, %c0_0] : memref<3x8xf32, #tpu.memory_space<vmem>>, vector<3x8xf32>
    %c0_1 = arith.constant 0 : index
    %c0_2 = arith.constant 0 : index
    %1 = vector.load %arg2[%c0_1, %c0_2] : memref<256x3xf32, #tpu.memory_space<vmem>>, vector<256x3xf32>
    %2 = vector.extract_strided_slice %1 {offsets = [0, 0], sizes = [256, 1], strides = [1, 1]} : vector<256x3xf32> to vector<256x1xf32>
    %3 = vector.extract_strided_slice %0 {offsets = [0, 0], sizes = [1, 8], strides = [1, 1]} : vector<3x8xf32> to vector<1x8xf32>
    %4 = vector.broadcast %2 : vector<256x1xf32> to vector<256x8xf32>
    %5 = vector.broadcast %3 : vector<1x8xf32> to vector<256x8xf32>
    %6 = arith.mulf %4, %5 : vector<256x8xf32>
    %7 = vector.extract_strided_slice %1 {offsets = [0, 1], sizes = [256, 1], strides = [1, 1]} : vector<256x3xf32> to vector<256x1xf32>
    %8 = vector.extract_strided_slice %0 {offsets = [1, 0], sizes = [1, 8], strides = [1, 1]} : vector<3x8xf32> to vector<1x8xf32>
    %9 = vector.broadcast %7 : vector<256x1xf32> to vector<256x8xf32>
    %10 = vector.broadcast %8 : vector<1x8xf32> to vector<256x8xf32>
    %11 = arith.mulf %9, %10 : vector<256x8xf32>
    %12 = arith.addf %6, %11 : vector<256x8xf32>
    %13 = vector.extract_strided_slice %1 {offsets = [0, 2], sizes = [256, 1], strides = [1, 1]} : vector<256x3xf32> to vector<256x1xf32>
    %14 = vector.extract_strided_slice %0 {offsets = [2, 0], sizes = [1, 8], strides = [1, 1]} : vector<3x8xf32> to vector<1x8xf32>
    %15 = vector.broadcast %13 : vector<256x1xf32> to vector<256x8xf32>
    %16 = vector.broadcast %14 : vector<1x8xf32> to vector<256x8xf32>
    %17 = arith.mulf %15, %16 : vector<256x8xf32>
    %18 = arith.addf %12, %17 : vector<256x8xf32>
    %c0_3 = arith.constant 0 : index
    %c0_4 = arith.constant 0 : index
    %19 = vector.load %arg3[%c0_3, %c0_4] : memref<256x1xf32, #tpu.memory_space<vmem>>, vector<256x1xf32>
    %20 = vector.broadcast %19 : vector<256x1xf32> to vector<256x8xf32>
    %21 = arith.addf %18, %20 : vector<256x8xf32>
    %cst = arith.constant 0.00999999977 : f32
    %22 = vector.broadcast %cst : f32 to vector<256x8xf32>
    %23 = arith.mulf %22, %21 : vector<256x8xf32>
    %24 = arith.maximumf %21, %23 : vector<256x8xf32>
    %c0_5 = arith.constant 0 : index
    %c0_6 = arith.constant 0 : index
    %25 = vector.load %arg4[%c0_5, %c0_6] : memref<256x256xbf16, #tpu.memory_space<vmem>>, vector<256x256xbf16>
    %26 = arith.truncf %24 : vector<256x8xf32> to vector<256x8xbf16>
    %cst_7 = arith.constant dense<0.000000e+00> : vector<256x8xf32>
    %27 = tpu.matmul %25, %26, %cst_7 {dimension_numbers = #tpu.dot_dimension_numbers<[1], [0], [0], [1], [0, 0, 1, 1], [], []>} : vector<256x256xbf16>, vector<256x8xbf16>, vector<256x8xf32> -> vector<256x8xf32>
    %c0_8 = arith.constant 0 : index
    %c0_9 = arith.constant 0 : index
    %28 = vector.load %arg5[%c0_8, %c0_9] : memref<256x1xf32, #tpu.memory_space<vmem>>, vector<256x1xf32>
    %29 = vector.broadcast %28 : vector<256x1xf32> to vector<256x8xf32>
    %30 = arith.addf %27, %29 : vector<256x8xf32>
    %cst_10 = arith.constant 0.00999999977 : f32
    %31 = vector.broadcast %cst_10 : f32 to vector<256x8xf32>
    %32 = arith.mulf %31, %30 : vector<256x8xf32>
    %33 = arith.maximumf %30, %32 : vector<256x8xf32>
    %c0_11 = arith.constant 0 : index
    %c0_12 = arith.constant 0 : index
    %34 = vector.load %arg6[%c0_11, %c0_12] : memref<256x1xf32, #tpu.memory_space<vmem>>, vector<256x1xf32>
    %35 = vector.broadcast %34 : vector<256x1xf32> to vector<256x8xf32>
    %36 = arith.mulf %33, %35 : vector<256x8xf32>
    %cst_13 = arith.constant dense<0.000000e+00> : vector<8xf32>
    %37 = vector.multi_reduction <add>, %36, %cst_13 [0] : vector<256x8xf32> to vector<8xf32>
    %38 = vector.shape_cast %37 : vector<8xf32> to vector<1x8xf32>
    %c0_14 = arith.constant 0 : index
    %c0_15 = arith.constant 0 : index
    %39 = vector.load %arg7[%c0_14, %c0_15] : memref<1x1xf32, #tpu.memory_space<vmem>>, vector<1x1xf32>
    %40 = vector.broadcast %39 : vector<1x1xf32> to vector<1x8xf32>
    %41 = arith.addf %38, %40 : vector<1x8xf32>
    %c0_16 = arith.constant 0 : index
    %c0_17 = arith.constant 0 : index
    %42 = vector.load %arg8[%c0_16, %c0_17] : memref<1x8xf32, #tpu.memory_space<vmem>>, vector<1x8xf32>
    tpu.vector_store %arg8[%c0_16, %c0_17], %41 {strides = array<i32>} : memref<1x8xf32, #tpu.memory_space<vmem>>, vector<1x8xf32>,
    return
  }
  func.func @transform_0(%arg0: i32) -> (i32, i32) {
    %c0_i32 = arith.constant 0 : i32
    %c0_i32_0 = arith.constant 0 : i32
    return %c0_i32, %arg0 : i32, i32
  }
  func.func @transform_1(%arg0: i32) -> (i32, i32) {
    %c0_i32 = arith.constant 0 : i32
    %c0_i32_0 = arith.constant 0 : i32
    %c0_i32_1 = arith.constant 0 : i32
    return %c0_i32, %c0_i32_0 : i32, i32
  }
  func.func @transform_2(%arg0: i32) -> (i32, i32) {
    %c0_i32 = arith.constant 0 : i32
    %c0_i32_0 = arith.constant 0 : i32
    %c0_i32_1 = arith.constant 0 : i32
    return %c0_i32, %c0_i32_0 : i32, i32
  }
  func.func @transform_3(%arg0: i32) -> (i32, i32) {
    %c0_i32 = arith.constant 0 : i32
    %c0_i32_0 = arith.constant 0 : i32
    %c0_i32_1 = arith.constant 0 : i32
    return %c0_i32, %c0_i32_0 : i32, i32
  }
  func.func @transform_4(%arg0: i32) -> (i32, i32) {
    %c0_i32 = arith.constant 0 : i32
    %c0_i32_0 = arith.constant 0 : i32
    %c0_i32_1 = arith.constant 0 : i32
    return %c0_i32, %c0_i32_0 : i32, i32
  }
  func.func @transform_5(%arg0: i32) -> (i32, i32) {
    %c0_i32 = arith.constant 0 : i32
    %c0_i32_0 = arith.constant 0 : i32
    %c0_i32_1 = arith.constant 0 : i32
    return %c0_i32, %c0_i32_0 : i32, i32
  }
  func.func @transform_6(%arg0: i32) -> (i32, i32) {
    %c0_i32 = arith.constant 0 : i32
    %c0_i32_0 = arith.constant 0 : i32
    %c0_i32_1 = arith.constant 0 : i32
    return %c0_i32, %c0_i32_0 : i32, i32
  }
  func.func @transform_7(%arg0: i32) -> (i32, i32) {
    %c0_i32 = arith.constant 0 : i32
    %c0_i32_0 = arith.constant 0 : i32
    return %c0_i32, %arg0 : i32, i32
  }
}

</mosaic_0001>

<llo_original>
// kernel: tpu_custom_call.1
$region0: #{tpu_custom_call.1}
  #allocation0 [shape = 'u32[]', space=smem, size = 0x4, offset = 0x4, fixed_abs, tag = 'smem constant byte address 0x4 - core index']
  #allocation1 [shape = 'u32[72,128]{1,0:T(1,128)}', space=vmem, size = 0x9000, scoped, tag = 'internal scratch']
  #allocation2 [shape = 'f32[1,1]{1,0:T(1,128)S(1)}', space=vmem, size = 0x200, scoped, tag = 'scoped memory for tpu_custom_call.1']
  %s0 = inlined_call_operand.vmem [shape: f32[3,8], index: 0, kind: input, shape index: {}]
  %s1 = inlined_call_operand.vmem [shape: f32[256,3], index: 1, kind: input, shape index: {}]
  %s2 = inlined_call_operand.vmem [shape: f32[256,1], index: 2, kind: input, shape index: {}]
  %s3 = inlined_call_operand.vmem [shape: bf16[256,256], index: 3, kind: input, shape index: {}]
  %s4 = inlined_call_operand.vmem [shape: f32[256,1], index: 4, kind: input, shape index: {}]
  %s5 = inlined_call_operand.vmem [shape: f32[256,1], index: 5, kind: input, shape index: {}]
  %s6 = inlined_call_operand.<no memory space> [shape: f32[1,1], index: 6, kind: input, shape index: {}]
  %s7 = inlined_call_operand.hbm [shape: f32[1,8], index: 7, kind: output, shape index: {}]
  %s8 = sld [smem:[#allocation0]]
  $region38: #{tpu_custom_call.1} parent=0
    _
  %s10 = ssub.s32 1, %s8
  %s11 = scalar_select 0, %s10, %s8
  %v12 = vstv %s6
  %13 = vst [vmem:[#allocation2] sm:$0x1] %v12
  $region1: #{tpu_custom_call.1} parent=0
    #allocation3 [shape = 'u8[512]{0}', space=vmem, size = 0x400, scoped, tag = 'output window, operand 0, single buffered']
    #allocation4 [shape = 's32[1]{0}', space=sflag, size = 0x4, scoped, tag = 'scoped memory for tpu_custom_call.1']
    %14 = vsyncpa [#allocation4], 0
    // Predicated region
    $region2: #{tpu_custom_call.1} parent=1 // pred_check
      _
    $region3: #{tpu_custom_call.1} parent=1 // pred_check_branch
      %16 = sbr.rel (0) target = $region5
    $region4: #{tpu_custom_call.1} parent=1 // pred_region
      _
    $region5: #{tpu_custom_call.1} parent=1 // pred_fallthru
      _
    // Predicated region
    $region6: #{tpu_custom_call.1} parent=1 // pred_check
      _
    $region7: #{tpu_custom_call.1} parent=1 // pred_check_branch
      %18 = sbr.rel (0) target = $region9
    $region8: #{tpu_custom_call.1} parent=1 // pred_region
      _
    $region9: #{tpu_custom_call.1} parent=1 // pred_fallthru
      _
    // Predicated region
    $region10: #{tpu_custom_call.1} parent=1 // pred_check
      _
    $region11: #{tpu_custom_call.1} parent=1 // pred_check_branch
      %20 = sbr.rel (0) target = $region13
    $region12: #{tpu_custom_call.1} parent=1 // pred_region
      _
    $region13: #{tpu_custom_call.1} parent=1 // pred_fallthru
      _
    // Predicated region
    $region14: #{tpu_custom_call.1} parent=1 // pred_check
      _
    $region15: #{tpu_custom_call.1} parent=1 // pred_check_branch
      %22 = sbr.rel (0) target = $region17
    $region16: #{tpu_custom_call.1} parent=1 // pred_region
      _
    $region17: #{tpu_custom_call.1} parent=1 // pred_fallthru
      _
    // Predicated region
    $region18: #{tpu_custom_call.1} parent=1 // pred_check
      _
    $region19: #{tpu_custom_call.1} parent=1 // pred_check_branch
      %24 = sbr.rel (0) target = $region21
    $region20: #{tpu_custom_call.1} parent=1 // pred_region
      _
    $region21: #{tpu_custom_call.1} parent=1 // pred_fallthru
      _
    // Predicated region
    $region22: #{tpu_custom_call.1} parent=1 // pred_check
      _
    $region23: #{tpu_custom_call.1} parent=1 // pred_check_branch
      %26 = sbr.rel (0) target = $region25
    $region24: #{tpu_custom_call.1} parent=1 // pred_region
      _
    $region25: #{tpu_custom_call.1} parent=1 // pred_fallthru
      _
    // Predicated region
    $region26: #{tpu_custom_call.1} parent=1 // pred_check
      _
    $region27: #{tpu_custom_call.1} parent=1 // pred_check_branch
      %28 = sbr.rel (0) target = $region29
    $region28: #{tpu_custom_call.1} parent=1 // pred_region
      _
    $region29: #{tpu_custom_call.1} parent=1 // pred_fallthru
      _
    %v29 = vld [vmem:[%s0] sm:$0x7]
    %v30 = vld [vmem:[%s1] sm:$0xff]
    %v31 = vld [vmem:[%s1 + $0x8] sm:$0xff]
    %v32 = vld [vmem:[%s1 + $0x10] sm:$0xff]
    %v33 = vld [vmem:[%s1 + $0x18] sm:$0xff]
    %v34 = vld [vmem:[%s1 + $0x20] sm:$0xff]
    %v35 = vld [vmem:[%s1 + $0x28] sm:$0xff]
    %v36 = vld [vmem:[%s1 + $0x30] sm:$0xff]
    %v37 = vld [vmem:[%s1 + $0x38] sm:$0xff]
    %v38 = vld [vmem:[%s1 + $0x40] sm:$0xff]
    %v39 = vld [vmem:[%s1 + $0x48] sm:$0xff]
    %v40 = vld [vmem:[%s1 + $0x50] sm:$0xff]
    %v41 = vld [vmem:[%s1 + $0x58] sm:$0xff]
    %v42 = vld [vmem:[%s1 + $0x60] sm:$0xff]
    %v43 = vld [vmem:[%s1 + $0x68] sm:$0xff]
    %v44 = vld [vmem:[%s1 + $0x70] sm:$0xff]
    %v45 = vld [vmem:[%s1 + $0x78] sm:$0xff]
    %v46 = vld [vmem:[%s1 + $0x80] sm:$0xff]
    %v47 = vld [vmem:[%s1 + $0x88] sm:$0xff]
    %v48 = vld [vmem:[%s1 + $0x90] sm:$0xff]
    %v49 = vld [vmem:[%s1 + $0x98] sm:$0xff]
    %v50 = vld [vmem:[%s1 + $0xa0] sm:$0xff]
    %v51 = vld [vmem:[%s1 + $0xa8] sm:$0xff]
    %v52 = vld [vmem:[%s1 + $0xb0] sm:$0xff]
    %v53 = vld [vmem:[%s1 + $0xb8] sm:$0xff]
    %v54 = vld [vmem:[%s1 + $0xc0] sm:$0xff]
    %v55 = vld [vmem:[%s1 + $0xc8] sm:$0xff]
    %v56 = vld [vmem:[%s1 + $0xd0] sm:$0xff]
    %v57 = vld [vmem:[%s1 + $0xd8] sm:$0xff]
    %v58 = vld [vmem:[%s1 + $0xe0] sm:$0xff]
    %v59 = vld [vmem:[%s1 + $0xe8] sm:$0xff]
    %v60 = vld [vmem:[%s1 + $0xf0] sm:$0xff]
    %v61 = vld [vmem:[%s1 + $0xf8] sm:$0xff]
    %63 = vset.pattern.permute.xlu0 0
    %64 = vperm.xlu0 %63, %v30
    %v65 = vpop.permute.xlu0 %64
    %68 = vset.pattern.permute.xlu0 0
    %69 = vperm.xlu0 %68, %v31
    %v70 = vpop.permute.xlu0 %69
    %73 = vset.pattern.permute.xlu0 0
    %74 = vperm.xlu0 %73, %v32
    %v75 = vpop.permute.xlu0 %74
    %78 = vset.pattern.permute.xlu0 0
    %79 = vperm.xlu0 %78, %v33
    %v80 = vpop.permute.xlu0 %79
    %83 = vset.pattern.permute.xlu0 0
    %84 = vperm.xlu0 %83, %v34
    %v85 = vpop.permute.xlu0 %84
    %88 = vset.pattern.permute.xlu0 0
    %89 = vperm.xlu0 %88, %v35
    %v90 = vpop.permute.xlu0 %89
    %93 = vset.pattern.permute.xlu0 0
    %94 = vperm.xlu0 %93, %v36
    %v95 = vpop.permute.xlu0 %94
    %98 = vset.pattern.permute.xlu0 0
    %99 = vperm.xlu0 %98, %v37
    %v100 = vpop.permute.xlu0 %99
    %103 = vset.pattern.permute.xlu0 0
    %104 = vperm.xlu0 %103, %v38
    %v105 = vpop.permute.xlu0 %104
    %108 = vset.pattern.permute.xlu0 0
    %109 = vperm.xlu0 %108, %v39
    %v110 = vpop.permute.xlu0 %109
    %113 = vset.pattern.permute.xlu0 0
    %114 = vperm.xlu0 %113, %v40
    %v115 = vpop.permute.xlu0 %114
    %118 = vset.pattern.permute.xlu0 0
    %119 = vperm.xlu0 %118, %v41
    %v120 = vpop.permute.xlu0 %119
    %123 = vset.pattern.permute.xlu0 0
    %124 = vperm.xlu0 %123, %v42
    %v125 = vpop.permute.xlu0 %124
    %128 = vset.pattern.permute.xlu0 0
    %129 = vperm.xlu0 %128, %v43
    %v130 = vpop.permute.xlu0 %129
    %133 = vset.pattern.permute.xlu0 0
    %134 = vperm.xlu0 %133, %v44
    %v135 = vpop.permute.xlu0 %134
    %138 = vset.pattern.permute.xlu0 0
    %139 = vperm.xlu0 %138, %v45
    %v140 = vpop.permute.xlu0 %139
    %143 = vset.pattern.permute.xlu0 0
    %144 = vperm.xlu0 %143, %v46
    %v145 = vpop.permute.xlu0 %144
    %148 = vset.pattern.permute.xlu0 0
    %149 = vperm.xlu0 %148, %v47
    %v150 = vpop.permute.xlu0 %149
    %153 = vset.pattern.permute.xlu0 0
    %154 = vperm.xlu0 %153, %v48
    %v155 = vpop.permute.xlu0 %154
    %158 = vset.pattern.permute.xlu0 0
    %159 = vperm.xlu0 %158, %v49
    %v160 = vpop.permute.xlu0 %159
    %163 = vset.pattern.permute.xlu0 0
    %164 = vperm.xlu0 %163, %v50
    %v165 = vpop.permute.xlu0 %164
    %168 = vset.pattern.permute.xlu0 0
    %169 = vperm.xlu0 %168, %v51
    %v170 = vpop.permute.xlu0 %169
    %173 = vset.pattern.permute.xlu0 0
    %174 = vperm.xlu0 %173, %v52
    %v175 = vpop.permute.xlu0 %174
    %178 = vset.pattern.permute.xlu0 0
    %179 = vperm.xlu0 %178, %v53
    %v180 = vpop.permute.xlu0 %179
    %183 = vset.pattern.permute.xlu0 0
    %184 = vperm.xlu0 %183, %v54
    %v185 = vpop.permute.xlu0 %184
    %188 = vset.pattern.permute.xlu0 0
    %189 = vperm.xlu0 %188, %v55
    %v190 = vpop.permute.xlu0 %189
    %193 = vset.pattern.permute.xlu0 0
    %194 = vperm.xlu0 %193, %v56
    %v195 = vpop.permute.xlu0 %194
    %198 = vset.pattern.permute.xlu0 0
    %199 = vperm.xlu0 %198, %v57
    %v200 = vpop.permute.xlu0 %199
    %203 = vset.pattern.permute.xlu0 0
    %204 = vperm.xlu0 %203, %v58
    %v205 = vpop.permute.xlu0 %204
    %208 = vset.pattern.permute.xlu0 0
    %209 = vperm.xlu0 %208, %v59
    %v210 = vpop.permute.xlu0 %209
    %213 = vset.pattern.permute.xlu0 0
    %214 = vperm.xlu0 %213, %v60
    %v215 = vpop.permute.xlu0 %214
    %218 = vset.pattern.permute.xlu0 0
    %219 = vperm.xlu0 %218, %v61
    %v220 = vpop.permute.xlu0 %219
    %v222 = vperm.slane %v29, 0
    %v223 = vmul.f32 %v65, %v222
    %v224 = vmul.f32 %v70, %v222
    %v225 = vmul.f32 %v75, %v222
    %v226 = vmul.f32 %v80, %v222
    %v227 = vmul.f32 %v85, %v222
    %v228 = vmul.f32 %v90, %v222
    %v229 = vmul.f32 %v95, %v222
    %v230 = vmul.f32 %v100, %v222
    %v231 = vmul.f32 %v105, %v222
    %v232 = vmul.f32 %v110, %v222
    %v233 = vmul.f32 %v115, %v222
    %v234 = vmul.f32 %v120, %v222
    %v235 = vmul.f32 %v125, %v222
    %v236 = vmul.f32 %v130, %v222
    %v237 = vmul.f32 %v135, %v222
    %v238 = vmul.f32 %v140, %v222
    %v239 = vmul.f32 %v145, %v222
    %v240 = vmul.f32 %v150, %v222
    %v241 = vmul.f32 %v155, %v222
    %v242 = vmul.f32 %v160, %v222
    %v243 = vmul.f32 %v165, %v222
    %v244 = vmul.f32 %v170, %v222
    %v245 = vmul.f32 %v175, %v222
    %v246 = vmul.f32 %v180, %v222
    %v247 = vmul.f32 %v185, %v222
    %v248 = vmul.f32 %v190, %v222
    %v249 = vmul.f32 %v195, %v222
    %v250 = vmul.f32 %v200, %v222
    %v251 = vmul.f32 %v205, %v222
    %v252 = vmul.f32 %v210, %v222
    %v253 = vmul.f32 %v215, %v222
    %v254 = vmul.f32 %v220, %v222
    %255 = vset.pattern.permute.xlu0 1
    %256 = vperm.xlu0 %255, %v30
    %v257 = vpop.permute.xlu0 %256
    %259 = vset.pattern.permute.xlu0 1
    %260 = vperm.xlu0 %259, %v31
    %v261 = vpop.permute.xlu0 %260
    %263 = vset.pattern.permute.xlu0 1
    %264 = vperm.xlu0 %263, %v32
    %v265 = vpop.permute.xlu0 %264
    %267 = vset.pattern.permute.xlu0 1
    %268 = vperm.xlu0 %267, %v33
    %v269 = vpop.permute.xlu0 %268
    %271 = vset.pattern.permute.xlu0 1
    %272 = vperm.xlu0 %271, %v34
    %v273 = vpop.permute.xlu0 %272
    %275 = vset.pattern.permute.xlu0 1
    %276 = vperm.xlu0 %275, %v35
    %v277 = vpop.permute.xlu0 %276
    %279 = vset.pattern.permute.xlu0 1
    %280 = vperm.xlu0 %279, %v36
    %v281 = vpop.permute.xlu0 %280
    %283 = vset.pattern.permute.xlu0 1
    %284 = vperm.xlu0 %283, %v37
    %v285 = vpop.permute.xlu0 %284
    %287 = vset.pattern.permute.xlu0 1
    %288 = vperm.xlu0 %287, %v38
    %v289 = vpop.permute.xlu0 %288
    %291 = vset.pattern.permute.xlu0 1
    %292 = vperm.xlu0 %291, %v39
    %v293 = vpop.permute.xlu0 %292
    %295 = vset.pattern.permute.xlu0 1
    %296 = vperm.xlu0 %295, %v40
    %v297 = vpop.permute.xlu0 %296
    %299 = vset.pattern.permute.xlu0 1
    %300 = vperm.xlu0 %299, %v41
    %v301 = vpop.permute.xlu0 %300
    %303 = vset.pattern.permute.xlu0 1
    %304 = vperm.xlu0 %303, %v42
    %v305 = vpop.permute.xlu0 %304
    %307 = vset.pattern.permute.xlu0 1
    %308 = vperm.xlu0 %307, %v43
    %v309 = vpop.permute.xlu0 %308
    %311 = vset.pattern.permute.xlu0 1
    %312 = vperm.xlu0 %311, %v44
    %v313 = vpop.permute.xlu0 %312
    %315 = vset.pattern.permute.xlu0 1
    %316 = vperm.xlu0 %315, %v45
    %v317 = vpop.permute.xlu0 %316
    %319 = vset.pattern.permute.xlu0 1
    %320 = vperm.xlu0 %319, %v46
    %v321 = vpop.permute.xlu0 %320
    %323 = vset.pattern.permute.xlu0 1
    %324 = vperm.xlu0 %323, %v47
    %v325 = vpop.permute.xlu0 %324
    %327 = vset.pattern.permute.xlu0 1
    %328 = vperm.xlu0 %327, %v48
    %v329 = vpop.permute.xlu0 %328
    %331 = vset.pattern.permute.xlu0 1
    %332 = vperm.xlu0 %331, %v49
    %v333 = vpop.permute.xlu0 %332
    %335 = vset.pattern.permute.xlu0 1
    %336 = vperm.xlu0 %335, %v50
    %v337 = vpop.permute.xlu0 %336
    %339 = vset.pattern.permute.xlu0 1
    %340 = vperm.xlu0 %339, %v51
    %v341 = vpop.permute.xlu0 %340
    %343 = vset.pattern.permute.xlu0 1
    %344 = vperm.xlu0 %343, %v52
    %v345 = vpop.permute.xlu0 %344
    %347 = vset.pattern.permute.xlu0 1
    %348 = vperm.xlu0 %347, %v53
    %v349 = vpop.permute.xlu0 %348
    %351 = vset.pattern.permute.xlu0 1
    %352 = vperm.xlu0 %351, %v54
    %v353 = vpop.permute.xlu0 %352
    %355 = vset.pattern.permute.xlu0 1
    %356 = vperm.xlu0 %355, %v55
    %v357 = vpop.permute.xlu0 %356
    %359 = vset.pattern.permute.xlu0 1
    %360 = vperm.xlu0 %359, %v56
    %v361 = vpop.permute.xlu0 %360
    %363 = vset.pattern.permute.xlu0 1
    %364 = vperm.xlu0 %363, %v57
    %v365 = vpop.permute.xlu0 %364
    %367 = vset.pattern.permute.xlu0 1
    %368 = vperm.xlu0 %367, %v58
    %v369 = vpop.permute.xlu0 %368
    %371 = vset.pattern.permute.xlu0 1
    %372 = vperm.xlu0 %371, %v59
    %v373 = vpop.permute.xlu0 %372
    %375 = vset.pattern.permute.xlu0 1
    %376 = vperm.xlu0 %375, %v60
    %v377 = vpop.permute.xlu0 %376
    %379 = vset.pattern.permute.xlu0 1
    %380 = vperm.xlu0 %379, %v61
    %v381 = vpop.permute.xlu0 %380
    %v383 = vperm.slane %v29, 1
    %v384 = vmul.f32 %v257, %v383
    %v385 = vmul.f32 %v261, %v383
    %v386 = vmul.f32 %v265, %v383
    %v387 = vmul.f32 %v269, %v383
    %v388 = vmul.f32 %v273, %v383
    %v389 = vmul.f32 %v277, %v383
    %v390 = vmul.f32 %v281, %v383
    %v391 = vmul.f32 %v285, %v383
    %v392 = vmul.f32 %v289, %v383
    %v393 = vmul.f32 %v293, %v383
    %v394 = vmul.f32 %v297, %v383
    %v395 = vmul.f32 %v301, %v383
    %v396 = vmul.f32 %v305, %v383
    %v397 = vmul.f32 %v309, %v383
    %v398 = vmul.f32 %v313, %v383
    %v399 = vmul.f32 %v317, %v383
    %v400 = vmul.f32 %v321, %v383
    %v401 = vmul.f32 %v325, %v383
    %v402 = vmul.f32 %v329, %v383
    %v403 = vmul.f32 %v333, %v383
    %v404 = vmul.f32 %v337, %v383
    %v405 = vmul.f32 %v341, %v383
    %v406 = vmul.f32 %v345, %v383
    %v407 = vmul.f32 %v349, %v383
    %v408 = vmul.f32 %v353, %v383
    %v409 = vmul.f32 %v357, %v383
    %v410 = vmul.f32 %v361, %v383
    %v411 = vmul.f32 %v365, %v383
    %v412 = vmul.f32 %v369, %v383
    %v413 = vmul.f32 %v373, %v383
    %v414 = vmul.f32 %v377, %v383
    %v415 = vmul.f32 %v381, %v383
    %v416 = vadd.f32 %v223, %v384
    %v417 = vadd.f32 %v224, %v385
    %v418 = vadd.f32 %v225, %v386
    %v419 = vadd.f32 %v226, %v387
    %v420 = vadd.f32 %v227, %v388
    %v421 = vadd.f32 %v228, %v389
    %v422 = vadd.f32 %v229, %v390
    %v423 = vadd.f32 %v230, %v391
    %v424 = vadd.f32 %v231, %v392
    %v425 = vadd.f32 %v232, %v393
    %v426 = vadd.f32 %v233, %v394
    %v427 = vadd.f32 %v234, %v395
    %v428 = vadd.f32 %v235, %v396
    %v429 = vadd.f32 %v236, %v397
    %v430 = vadd.f32 %v237, %v398
    %v431 = vadd.f32 %v238, %v399
    %v432 = vadd.f32 %v239, %v400
    %v433 = vadd.f32 %v240, %v401
    %v434 = vadd.f32 %v241, %v402
    %v435 = vadd.f32 %v242, %v403
    %v436 = vadd.f32 %v243, %v404
    %v437 = vadd.f32 %v244, %v405
    %v438 = vadd.f32 %v245, %v406
    %v439 = vadd.f32 %v246, %v407
    %v440 = vadd.f32 %v247, %v408
    %v441 = vadd.f32 %v248, %v409
    %v442 = vadd.f32 %v249, %v410
    %v443 = vadd.f32 %v250, %v411
    %v444 = vadd.f32 %v251, %v412
    %v445 = vadd.f32 %v252, %v413
    %v446 = vadd.f32 %v253, %v414
    %v447 = vadd.f32 %v254, %v415
    %448 = vset.pattern.permute.xlu0 2
    %449 = vperm.xlu0 %448, %v30
    %v450 = vpop.permute.xlu0 %449
    %452 = vset.pattern.permute.xlu0 2
    %453 = vperm.xlu0 %452, %v31
    %v454 = vpop.permute.xlu0 %453
    %456 = vset.pattern.permute.xlu0 2
    %457 = vperm.xlu0 %456, %v32
    %v458 = vpop.permute.xlu0 %457
    %460 = vset.pattern.permute.xlu0 2
    %461 = vperm.xlu0 %460, %v33
    %v462 = vpop.permute.xlu0 %461
    %464 = vset.pattern.permute.xlu0 2
    %465 = vperm.xlu0 %464, %v34
    %v466 = vpop.permute.xlu0 %465
    %468 = vset.pattern.permute.xlu0 2
    %469 = vperm.xlu0 %468, %v35
    %v470 = vpop.permute.xlu0 %469
    %472 = vset.pattern.permute.xlu0 2
    %473 = vperm.xlu0 %472, %v36
    %v474 = vpop.permute.xlu0 %473
    %476 = vset.pattern.permute.xlu0 2
    %477 = vperm.xlu0 %476, %v37
    %v478 = vpop.permute.xlu0 %477
    %480 = vset.pattern.permute.xlu0 2
    %481 = vperm.xlu0 %480, %v38
    %v482 = vpop.permute.xlu0 %481
    %484 = vset.pattern.permute.xlu0 2
    %485 = vperm.xlu0 %484, %v39
    %v486 = vpop.permute.xlu0 %485
    %488 = vset.pattern.permute.xlu0 2
    %489 = vperm.xlu0 %488, %v40
    %v490 = vpop.permute.xlu0 %489
    %492 = vset.pattern.permute.xlu0 2
    %493 = vperm.xlu0 %492, %v41
    %v494 = vpop.permute.xlu0 %493
    %496 = vset.pattern.permute.xlu0 2
    %497 = vperm.xlu0 %496, %v42
    %v498 = vpop.permute.xlu0 %497
    %500 = vset.pattern.permute.xlu0 2
    %501 = vperm.xlu0 %500, %v43
    %v502 = vpop.permute.xlu0 %501
    %504 = vset.pattern.permute.xlu0 2
    %505 = vperm.xlu0 %504, %v44
    %v506 = vpop.permute.xlu0 %505
    %508 = vset.pattern.permute.xlu0 2
    %509 = vperm.xlu0 %508, %v45
    %v510 = vpop.permute.xlu0 %509
    %512 = vset.pattern.permute.xlu0 2
    %513 = vperm.xlu0 %512, %v46
    %v514 = vpop.permute.xlu0 %513
    %516 = vset.pattern.permute.xlu0 2
    %517 = vperm.xlu0 %516, %v47
    %v518 = vpop.permute.xlu0 %517
    %520 = vset.pattern.permute.xlu0 2
    %521 = vperm.xlu0 %520, %v48
    %v522 = vpop.permute.xlu0 %521
    %524 = vset.pattern.permute.xlu0 2
    %525 = vperm.xlu0 %524, %v49
    %v526 = vpop.permute.xlu0 %525
    %528 = vset.pattern.permute.xlu0 2
    %529 = vperm.xlu0 %528, %v50
    %v530 = vpop.permute.xlu0 %529
    %532 = vset.pattern.permute.xlu0 2
    %533 = vperm.xlu0 %532, %v51
    %v534 = vpop.permute.xlu0 %533
    %536 = vset.pattern.permute.xlu0 2
    %537 = vperm.xlu0 %536, %v52
    %v538 = vpop.permute.xlu0 %537
    %540 = vset.pattern.permute.xlu0 2
    %541 = vperm.xlu0 %540, %v53
    %v542 = vpop.permute.xlu0 %541
    %544 = vset.pattern.permute.xlu0 2
    %545 = vperm.xlu0 %544, %v54
    %v546 = vpop.permute.xlu0 %545
    %548 = vset.pattern.permute.xlu0 2
    %549 = vperm.xlu0 %548, %v55
    %v550 = vpop.permute.xlu0 %549
    %552 = vset.pattern.permute.xlu0 2
    %553 = vperm.xlu0 %552, %v56
    %v554 = vpop.permute.xlu0 %553
    %556 = vset.pattern.permute.xlu0 2
    %557 = vperm.xlu0 %556, %v57
    %v558 = vpop.permute.xlu0 %557
    %560 = vset.pattern.permute.xlu0 2
    %561 = vperm.xlu0 %560, %v58
    %v562 = vpop.permute.xlu0 %561
    %564 = vset.pattern.permute.xlu0 2
    %565 = vperm.xlu0 %564, %v59
    %v566 = vpop.permute.xlu0 %565
    %568 = vset.pattern.permute.xlu0 2
    %569 = vperm.xlu0 %568, %v60
    %v570 = vpop.permute.xlu0 %569
    %572 = vset.pattern.permute.xlu0 2
    %573 = vperm.xlu0 %572, %v61
    %v574 = vpop.permute.xlu0 %573
    %v576 = vperm.slane %v29, 2
    %v577 = vmul.f32 %v450, %v576
    %v578 = vmul.f32 %v454, %v576
    %v579 = vmul.f32 %v458, %v576
    %v580 = vmul.f32 %v462, %v576
    %v581 = vmul.f32 %v466, %v576
    %v582 = vmul.f32 %v470, %v576
    %v583 = vmul.f32 %v474, %v576
    %v584 = vmul.f32 %v478, %v576
    %v585 = vmul.f32 %v482, %v576
    %v586 = vmul.f32 %v486, %v576
    %v587 = vmul.f32 %v490, %v576
    %v588 = vmul.f32 %v494, %v576
    %v589 = vmul.f32 %v498, %v576
    %v590 = vmul.f32 %v502, %v576
    %v591 = vmul.f32 %v506, %v576
    %v592 = vmul.f32 %v510, %v576
    %v593 = vmul.f32 %v514, %v576
    %v594 = vmul.f32 %v518, %v576
    %v595 = vmul.f32 %v522, %v576
    %v596 = vmul.f32 %v526, %v576
    %v597 = vmul.f32 %v530, %v576
    %v598 = vmul.f32 %v534, %v576
    %v599 = vmul.f32 %v538, %v576
    %v600 = vmul.f32 %v542, %v576
    %v601 = vmul.f32 %v546, %v576
    %v602 = vmul.f32 %v550, %v576
    %v603 = vmul.f32 %v554, %v576
    %v604 = vmul.f32 %v558, %v576
    %v605 = vmul.f32 %v562, %v576
    %v606 = vmul.f32 %v566, %v576
    %v607 = vmul.f32 %v570, %v576
    %v608 = vmul.f32 %v574, %v576
    %v609 = vadd.f32 %v416, %v577
    %v610 = vadd.f32 %v417, %v578
    %v611 = vadd.f32 %v418, %v579
    %v612 = vadd.f32 %v419, %v580
    %v613 = vadd.f32 %v420, %v581
    %v614 = vadd.f32 %v421, %v582
    %v615 = vadd.f32 %v422, %v583
    %v616 = vadd.f32 %v423, %v584
    %v617 = vadd.f32 %v424, %v585
    %v618 = vadd.f32 %v425, %v586
    %v619 = vadd.f32 %v426, %v587
    %v620 = vadd.f32 %v427, %v588
    %v621 = vadd.f32 %v428, %v589
    %v622 = vadd.f32 %v429, %v590
    %v623 = vadd.f32 %v430, %v591
    %v624 = vadd.f32 %v431, %v592
    %v625 = vadd.f32 %v432, %v593
    %v626 = vadd.f32 %v433, %v594
    %v627 = vadd.f32 %v434, %v595
    %v628 = vadd.f32 %v435, %v596
    %v629 = vadd.f32 %v436, %v597
    %v630 = vadd.f32 %v437, %v598
    %v631 = vadd.f32 %v438, %v599
    %v632 = vadd.f32 %v439, %v600
    %v633 = vadd.f32 %v440, %v601
    %v634 = vadd.f32 %v441, %v602
    %v635 = vadd.f32 %v442, %v603
    %v636 = vadd.f32 %v443, %v604
    %v637 = vadd.f32 %v444, %v605
    %v638 = vadd.f32 %v445, %v606
    %v639 = vadd.f32 %v446, %v607
    %v640 = vadd.f32 %v447, %v608
    %v641 = vld [vmem:[%s2] sm:$0xff]
    %v642 = vld [vmem:[%s2 + $0x8] sm:$0xff]
    %v643 = vld [vmem:[%s2 + $0x10] sm:$0xff]
    %v644 = vld [vmem:[%s2 + $0x18] sm:$0xff]
    %v645 = vld [vmem:[%s2 + $0x20] sm:$0xff]
    %v646 = vld [vmem:[%s2 + $0x28] sm:$0xff]
    %v647 = vld [vmem:[%s2 + $0x30] sm:$0xff]
    %v648 = vld [vmem:[%s2 + $0x38] sm:$0xff]
    %v649 = vld [vmem:[%s2 + $0x40] sm:$0xff]
    %v650 = vld [vmem:[%s2 + $0x48] sm:$0xff]
    %v651 = vld [vmem:[%s2 + $0x50] sm:$0xff]
    %v652 = vld [vmem:[%s2 + $0x58] sm:$0xff]
    %v653 = vld [vmem:[%s2 + $0x60] sm:$0xff]
    %v654 = vld [vmem:[%s2 + $0x68] sm:$0xff]
    %v655 = vld [vmem:[%s2 + $0x70] sm:$0xff]
    %v656 = vld [vmem:[%s2 + $0x78] sm:$0xff]
    %v657 = vld [vmem:[%s2 + $0x80] sm:$0xff]
    %v658 = vld [vmem:[%s2 + $0x88] sm:$0xff]
    %v659 = vld [vmem:[%s2 + $0x90] sm:$0xff]
    %v660 = vld [vmem:[%s2 + $0x98] sm:$0xff]
    %v661 = vld [vmem:[%s2 + $0xa0] sm:$0xff]
    %v662 = vld [vmem:[%s2 + $0xa8] sm:$0xff]
    %v663 = vld [vmem:[%s2 + $0xb0] sm:$0xff]
    %v664 = vld [vmem:[%s2 + $0xb8] sm:$0xff]
    %v665 = vld [vmem:[%s2 + $0xc0] sm:$0xff]
    %v666 = vld [vmem:[%s2 + $0xc8] sm:$0xff]
    %v667 = vld [vmem:[%s2 + $0xd0] sm:$0xff]
    %v668 = vld [vmem:[%s2 + $0xd8] sm:$0xff]
    %v669 = vld [vmem:[%s2 + $0xe0] sm:$0xff]
    %v670 = vld [vmem:[%s2 + $0xe8] sm:$0xff]
    %v671 = vld [vmem:[%s2 + $0xf0] sm:$0xff]
    %v672 = vld [vmem:[%s2 + $0xf8] sm:$0xff]
    %674 = vset.pattern.permute.xlu0 0
    %675 = vperm.xlu0 %674, %v641
    %v676 = vpop.permute.xlu0 %675
    %679 = vset.pattern.permute.xlu0 0
    %680 = vperm.xlu0 %679, %v642
    %v681 = vpop.permute.xlu0 %680
    %684 = vset.pattern.permute.xlu0 0
    %685 = vperm.xlu0 %684, %v643
    %v686 = vpop.permute.xlu0 %685
    %689 = vset.pattern.permute.xlu0 0
    %690 = vperm.xlu0 %689, %v644
    %v691 = vpop.permute.xlu0 %690
    %694 = vset.pattern.permute.xlu0 0
    %695 = vperm.xlu0 %694, %v645
    %v696 = vpop.permute.xlu0 %695
    %699 = vset.pattern.permute.xlu0 0
    %700 = vperm.xlu0 %699, %v646
    %v701 = vpop.permute.xlu0 %700
    %704 = vset.pattern.permute.xlu0 0
    %705 = vperm.xlu0 %704, %v647
    %v706 = vpop.permute.xlu0 %705
    %709 = vset.pattern.permute.xlu0 0
    %710 = vperm.xlu0 %709, %v648
    %v711 = vpop.permute.xlu0 %710
    %714 = vset.pattern.permute.xlu0 0
    %715 = vperm.xlu0 %714, %v649
    %v716 = vpop.permute.xlu0 %715
    %719 = vset.pattern.permute.xlu0 0
    %720 = vperm.xlu0 %719, %v650
    %v721 = vpop.permute.xlu0 %720
    %724 = vset.pattern.permute.xlu0 0
    %725 = vperm.xlu0 %724, %v651
    %v726 = vpop.permute.xlu0 %725
    %729 = vset.pattern.permute.xlu0 0
    %730 = vperm.xlu0 %729, %v652
    %v731 = vpop.permute.xlu0 %730
    %734 = vset.pattern.permute.xlu0 0
    %735 = vperm.xlu0 %734, %v653
    %v736 = vpop.permute.xlu0 %735
    %739 = vset.pattern.permute.xlu0 0
    %740 = vperm.xlu0 %739, %v654
    %v741 = vpop.permute.xlu0 %740
    %744 = vset.pattern.permute.xlu0 0
    %745 = vperm.xlu0 %744, %v655
    %v746 = vpop.permute.xlu0 %745
    %749 = vset.pattern.permute.xlu0 0
    %750 = vperm.xlu0 %749, %v656
    %v751 = vpop.permute.xlu0 %750
    %754 = vset.pattern.permute.xlu0 0
    %755 = vperm.xlu0 %754, %v657
    %v756 = vpop.permute.xlu0 %755
    %759 = vset.pattern.permute.xlu0 0
    %760 = vperm.xlu0 %759, %v658
    %v761 = vpop.permute.xlu0 %760
    %764 = vset.pattern.permute.xlu0 0
    %765 = vperm.xlu0 %764, %v659
    %v766 = vpop.permute.xlu0 %765
    %769 = vset.pattern.permute.xlu0 0
    %770 = vperm.xlu0 %769, %v660
    %v771 = vpop.permute.xlu0 %770
    %774 = vset.pattern.permute.xlu0 0
    %775 = vperm.xlu0 %774, %v661
    %v776 = vpop.permute.xlu0 %775
    %779 = vset.pattern.permute.xlu0 0
    %780 = vperm.xlu0 %779, %v662
    %v781 = vpop.permute.xlu0 %780
    %784 = vset.pattern.permute.xlu0 0
    %785 = vperm.xlu0 %784, %v663
    %v786 = vpop.permute.xlu0 %785
    %789 = vset.pattern.permute.xlu0 0
    %790 = vperm.xlu0 %789, %v664
    %v791 = vpop.permute.xlu0 %790
    %794 = vset.pattern.permute.xlu0 0
    %795 = vperm.xlu0 %794, %v665
    %v796 = vpop.permute.xlu0 %795
    %799 = vset.pattern.permute.xlu0 0
    %800 = vperm.xlu0 %799, %v666
    %v801 = vpop.permute.xlu0 %800
    %804 = vset.pattern.permute.xlu0 0
    %805 = vperm.xlu0 %804, %v667
    %v806 = vpop.permute.xlu0 %805
    %809 = vset.pattern.permute.xlu0 0
    %810 = vperm.xlu0 %809, %v668
    %v811 = vpop.permute.xlu0 %810
    %814 = vset.pattern.permute.xlu0 0
    %815 = vperm.xlu0 %814, %v669
    %v816 = vpop.permute.xlu0 %815
    %819 = vset.pattern.permute.xlu0 0
    %820 = vperm.xlu0 %819, %v670
    %v821 = vpop.permute.xlu0 %820
    %824 = vset.pattern.permute.xlu0 0
    %825 = vperm.xlu0 %824, %v671
    %v826 = vpop.permute.xlu0 %825
    %829 = vset.pattern.permute.xlu0 0
    %830 = vperm.xlu0 %829, %v672
    %v831 = vpop.permute.xlu0 %830
    %v833 = vadd.f32 %v609, %v676
    %v834 = vadd.f32 %v610, %v681
    %v835 = vadd.f32 %v611, %v686
    %v836 = vadd.f32 %v612, %v691
    %v837 = vadd.f32 %v613, %v696
    %v838 = vadd.f32 %v614, %v701
    %v839 = vadd.f32 %v615, %v706
    %v840 = vadd.f32 %v616, %v711
    %v841 = vadd.f32 %v617, %v716
    %v842 = vadd.f32 %v618, %v721
    %v843 = vadd.f32 %v619, %v726
    %v844 = vadd.f32 %v620, %v731
    %v845 = vadd.f32 %v621, %v736
    %v846 = vadd.f32 %v622, %v741
    %v847 = vadd.f32 %v623, %v746
    %v848 = vadd.f32 %v624, %v751
    %v849 = vadd.f32 %v625, %v756
    %v850 = vadd.f32 %v626, %v761
    %v851 = vadd.f32 %v627, %v766
    %v852 = vadd.f32 %v628, %v771
    %v853 = vadd.f32 %v629, %v776
    %v854 = vadd.f32 %v630, %v781
    %v855 = vadd.f32 %v631, %v786
    %v856 = vadd.f32 %v632, %v791
    %v857 = vadd.f32 %v633, %v796
    %v858 = vadd.f32 %v634, %v801
    %v859 = vadd.f32 %v635, %v806
    %v860 = vadd.f32 %v636, %v811
    %v861 = vadd.f32 %v637, %v816
    %v862 = vadd.f32 %v638, %v821
    %v863 = vadd.f32 %v639, %v826
    %v864 = vadd.f32 %v640, %v831
    %v865 = vmul.f32 %v833, 0.01
    %v866 = vmul.f32 %v834, 0.01
    %v867 = vmul.f32 %v835, 0.01
    %v868 = vmul.f32 %v836, 0.01
    %v869 = vmul.f32 %v837, 0.01
    %v870 = vmul.f32 %v838, 0.01
    %v871 = vmul.f32 %v839, 0.01
    %v872 = vmul.f32 %v840, 0.01
    %v873 = vmul.f32 %v841, 0.01
    %v874 = vmul.f32 %v842, 0.01
    %v875 = vmul.f32 %v843, 0.01
    %v876 = vmul.f32 %v844, 0.01
    %v877 = vmul.f32 %v845, 0.01
    %v878 = vmul.f32 %v846, 0.01
    %v879 = vmul.f32 %v847, 0.01
    %v880 = vmul.f32 %v848, 0.01
    %v881 = vmul.f32 %v849, 0.01
    %v882 = vmul.f32 %v850, 0.01
    %v883 = vmul.f32 %v851, 0.01
    %v884 = vmul.f32 %v852, 0.01
    %v885 = vmul.f32 %v853, 0.01
    %v886 = vmul.f32 %v854, 0.01
    %v887 = vmul.f32 %v855, 0.01
    %v888 = vmul.f32 %v856, 0.01
    %v889 = vmul.f32 %v857, 0.01
    %v890 = vmul.f32 %v858, 0.01
    %v891 = vmul.f32 %v859, 0.01
    %v892 = vmul.f32 %v860, 0.01
    %v893 = vmul.f32 %v861, 0.01
    %v894 = vmul.f32 %v862, 0.01
    %v895 = vmul.f32 %v863, 0.01
    %v896 = vmul.f32 %v864, 0.01
    %v897 = vmax.f32 %v833, %v865
    %v898 = vmax.f32 %v834, %v866
    %v899 = vmax.f32 %v835, %v867
    %v900 = vmax.f32 %v836, %v868
    %v901 = vmax.f32 %v837, %v869
    %v902 = vmax.f32 %v838, %v870
    %v903 = vmax.f32 %v839, %v871
    %v904 = vmax.f32 %v840, %v872
    %v905 = vmax.f32 %v841, %v873
    %v906 = vmax.f32 %v842, %v874
    %v907 = vmax.f32 %v843, %v875
    %v908 = vmax.f32 %v844, %v876
    %v909 = vmax.f32 %v845, %v877
    %v910 = vmax.f32 %v846, %v878
    %v911 = vmax.f32 %v847, %v879
    %v912 = vmax.f32 %v848, %v880
    %v913 = vmax.f32 %v849, %v881
    %v914 = vmax.f32 %v850, %v882
    %v915 = vmax.f32 %v851, %v883
    %v916 = vmax.f32 %v852, %v884
    %v917 = vmax.f32 %v853, %v885
    %v918 = vmax.f32 %v854, %v886
    %v919 = vmax.f32 %v855, %v887
    %v920 = vmax.f32 %v856, %v888
    %v921 = vmax.f32 %v857, %v889
    %v922 = vmax.f32 %v858, %v890
    %v923 = vmax.f32 %v859, %v891
    %v924 = vmax.f32 %v860, %v892
    %v925 = vmax.f32 %v861, %v893
    %v926 = vmax.f32 %v862, %v894
    %v927 = vmax.f32 %v863, %v895
    %v928 = vmax.f32 %v864, %v896
    %v929 = vld [vmem:[%s3] sm:$0xff]
    %v930 = vld [vmem:[%s3 + $0x8] sm:$0xff]
    %v931 = vld [vmem:[%s3 + $0x10] sm:$0xff]
    %v932 = vld [vmem:[%s3 + $0x18] sm:$0xff]
    %v933 = vld [vmem:[%s3 + $0x20] sm:$0xff]
    %v934 = vld [vmem:[%s3 + $0x28] sm:$0xff]
    %v935 = vld [vmem:[%s3 + $0x30] sm:$0xff]
    %v936 = vld [vmem:[%s3 + $0x38] sm:$0xff]
    %v937 = vld [vmem:[%s3 + $0x40] sm:$0xff]
    %v938 = vld [vmem:[%s3 + $0x48] sm:$0xff]
    %v939 = vld [vmem:[%s3 + $0x50] sm:$0xff]
    %v940 = vld [vmem:[%s3 + $0x58] sm:$0xff]
    %v941 = vld [vmem:[%s3 + $0x60] sm:$0xff]
    %v942 = vld [vmem:[%s3 + $0x68] sm:$0xff]
    %v943 = vld [vmem:[%s3 + $0x70] sm:$0xff]
    %v944 = vld [vmem:[%s3 + $0x78] sm:$0xff]
    %v945 = vld [vmem:[%s3 + $0x80] sm:$0xff]
    %v946 = vld [vmem:[%s3 + $0x88] sm:$0xff]
    %v947 = vld [vmem:[%s3 + $0x90] sm:$0xff]
    %v948 = vld [vmem:[%s3 + $0x98] sm:$0xff]
    %v949 = vld [vmem:[%s3 + $0xa0] sm:$0xff]
    %v950 = vld [vmem:[%s3 + $0xa8] sm:$0xff]
    %v951 = vld [vmem:[%s3 + $0xb0] sm:$0xff]
    %v952 = vld [vmem:[%s3 + $0xb8] sm:$0xff]
    %v953 = vld [vmem:[%s3 + $0xc0] sm:$0xff]
    %v954 = vld [vmem:[%s3 + $0xc8] sm:$0xff]
    %v955 = vld [vmem:[%s3 + $0xd0] sm:$0xff]
    %v956 = vld [vmem:[%s3 + $0xd8] sm:$0xff]
    %v957 = vld [vmem:[%s3 + $0xe0] sm:$0xff]
    %v958 = vld [vmem:[%s3 + $0xe8] sm:$0xff]
    %v959 = vld [vmem:[%s3 + $0xf0] sm:$0xff]
    %v960 = vld [vmem:[%s3 + $0xf8] sm:$0xff]
    %v961 = vpack.c.bf16 %v898, %v897
    %v962 = vpack.c.bf16 %v900, %v899
    %v963 = vpack.c.bf16 %v902, %v901
    %v964 = vpack.c.bf16 %v904, %v903
    %v965 = vpack.c.bf16 %v906, %v905
    %v966 = vpack.c.bf16 %v908, %v907
    %v967 = vpack.c.bf16 %v910, %v909
    %v968 = vpack.c.bf16 %v912, %v911
    %v969 = vpack.c.bf16 %v914, %v913
    %v970 = vpack.c.bf16 %v916, %v915
    %v971 = vpack.c.bf16 %v918, %v917
    %v972 = vpack.c.bf16 %v920, %v919
    %v973 = vpack.c.bf16 %v922, %v921
    %v974 = vpack.c.bf16 %v924, %v923
    %v975 = vpack.c.bf16 %v926, %v925
    %v976 = vpack.c.bf16 %v928, %v927
    %v977 = vld [vmem:[%s4] sm:$0xff]
    %v978 = vld [vmem:[%s4 + $0x8] sm:$0xff]
    %v979 = vld [vmem:[%s4 + $0x10] sm:$0xff]
    %v980 = vld [vmem:[%s4 + $0x18] sm:$0xff]
    %v981 = vld [vmem:[%s4 + $0x20] sm:$0xff]
    %v982 = vld [vmem:[%s4 + $0x28] sm:$0xff]
    %v983 = vld [vmem:[%s4 + $0x30] sm:$0xff]
    %v984 = vld [vmem:[%s4 + $0x38] sm:$0xff]
    %v985 = vld [vmem:[%s4 + $0x40] sm:$0xff]
    %v986 = vld [vmem:[%s4 + $0x48] sm:$0xff]
    %v987 = vld [vmem:[%s4 + $0x50] sm:$0xff]
    %v988 = vld [vmem:[%s4 + $0x58] sm:$0xff]
    %v989 = vld [vmem:[%s4 + $0x60] sm:$0xff]
    %v990 = vld [vmem:[%s4 + $0x68] sm:$0xff]
    %v991 = vld [vmem:[%s4 + $0x70] sm:$0xff]
    %v992 = vld [vmem:[%s4 + $0x78] sm:$0xff]
    %v993 = vld [vmem:[%s4 + $0x80] sm:$0xff]
    %v994 = vld [vmem:[%s4 + $0x88] sm:$0xff]
    %v995 = vld [vmem:[%s4 + $0x90] sm:$0xff]
    %v996 = vld [vmem:[%s4 + $0x98] sm:$0xff]
    %v997 = vld [vmem:[%s4 + $0xa0] sm:$0xff]
    %v998 = vld [vmem:[%s4 + $0xa8] sm:$0xff]
    %v999 = vld [vmem:[%s4 + $0xb0] sm:$0xff]
    %v1000 = vld [vmem:[%s4 + $0xb8] sm:$0xff]
    %v1001 = vld [vmem:[%s4 + $0xc0] sm:$0xff]
    %v1002 = vld [vmem:[%s4 + $0xc8] sm:$0xff]
    %v1003 = vld [vmem:[%s4 + $0xd0] sm:$0xff]
    %v1004 = vld [vmem:[%s4 + $0xd8] sm:$0xff]
    %v1005 = vld [vmem:[%s4 + $0xe0] sm:$0xff]
    %v1006 = vld [vmem:[%s4 + $0xe8] sm:$0xff]
    %v1007 = vld [vmem:[%s4 + $0xf0] sm:$0xff]
    %v1008 = vld [vmem:[%s4 + $0xf8] sm:$0xff]
    %1010 = vset.pattern.permute.xlu0 0
    %1011 = vperm.xlu0 %1010, %v977
    %v1012 = vpop.permute.xlu0 %1011
    %1015 = vset.pattern.permute.xlu0 0
    %1016 = vperm.xlu0 %1015, %v978
    %v1017 = vpop.permute.xlu0 %1016
    %1020 = vset.pattern.permute.xlu0 0
    %1021 = vperm.xlu0 %1020, %v979
    %v1022 = vpop.permute.xlu0 %1021
    %1025 = vset.pattern.permute.xlu0 0
    %1026 = vperm.xlu0 %1025, %v980
    %v1027 = vpop.permute.xlu0 %1026
    %1030 = vset.pattern.permute.xlu0 0
    %1031 = vperm.xlu0 %1030, %v981
    %v1032 = vpop.permute.xlu0 %1031
    %1035 = vset.pattern.permute.xlu0 0
    %1036 = vperm.xlu0 %1035, %v982
    %v1037 = vpop.permute.xlu0 %1036
    %1040 = vset.pattern.permute.xlu0 0
    %1041 = vperm.xlu0 %1040, %v983
    %v1042 = vpop.permute.xlu0 %1041
    %1045 = vset.pattern.permute.xlu0 0
    %1046 = vperm.xlu0 %1045, %v984
    %v1047 = vpop.permute.xlu0 %1046
    %1050 = vset.pattern.permute.xlu0 0
    %1051 = vperm.xlu0 %1050, %v985
    %v1052 = vpop.permute.xlu0 %1051
    %1055 = vset.pattern.permute.xlu0 0
    %1056 = vperm.xlu0 %1055, %v986
    %v1057 = vpop.permute.xlu0 %1056
    %1060 = vset.pattern.permute.xlu0 0
    %1061 = vperm.xlu0 %1060, %v987
    %v1062 = vpop.permute.xlu0 %1061
    %1065 = vset.pattern.permute.xlu0 0
    %1066 = vperm.xlu0 %1065, %v988
    %v1067 = vpop.permute.xlu0 %1066
    %1070 = vset.pattern.permute.xlu0 0
    %1071 = vperm.xlu0 %1070, %v989
    %v1072 = vpop.permute.xlu0 %1071
    %1075 = vset.pattern.permute.xlu0 0
    %1076 = vperm.xlu0 %1075, %v990
    %v1077 = vpop.permute.xlu0 %1076
    %1080 = vset.pattern.permute.xlu0 0
    %1081 = vperm.xlu0 %1080, %v991
    %v1082 = vpop.permute.xlu0 %1081
    %1085 = vset.pattern.permute.xlu0 0
    %1086 = vperm.xlu0 %1085, %v992
    %v1087 = vpop.permute.xlu0 %1086
    %1090 = vset.pattern.permute.xlu0 0
    %1091 = vperm.xlu0 %1090, %v993
    %v1092 = vpop.permute.xlu0 %1091
    %1095 = vset.pattern.permute.xlu0 0
    %1096 = vperm.xlu0 %1095, %v994
    %v1097 = vpop.permute.xlu0 %1096
    %1100 = vset.pattern.permute.xlu0 0
    %1101 = vperm.xlu0 %1100, %v995
    %v1102 = vpop.permute.xlu0 %1101
    %1105 = vset.pattern.permute.xlu0 0
    %1106 = vperm.xlu0 %1105, %v996
    %v1107 = vpop.permute.xlu0 %1106
    %1110 = vset.pattern.permute.xlu0 0
    %1111 = vperm.xlu0 %1110, %v997
    %v1112 = vpop.permute.xlu0 %1111
    %1115 = vset.pattern.permute.xlu0 0
    %1116 = vperm.xlu0 %1115, %v998
    %v1117 = vpop.permute.xlu0 %1116
    %1120 = vset.pattern.permute.xlu0 0
    %1121 = vperm.xlu0 %1120, %v999
    %v1122 = vpop.permute.xlu0 %1121
    %1125 = vset.pattern.permute.xlu0 0
    %1126 = vperm.xlu0 %1125, %v1000
    %v1127 = vpop.permute.xlu0 %1126
    %1130 = vset.pattern.permute.xlu0 0
    %1131 = vperm.xlu0 %1130, %v1001
    %v1132 = vpop.permute.xlu0 %1131
    %1135 = vset.pattern.permute.xlu0 0
    %1136 = vperm.xlu0 %1135, %v1002
    %v1137 = vpop.permute.xlu0 %1136
    %1140 = vset.pattern.permute.xlu0 0
    %1141 = vperm.xlu0 %1140, %v1003
    %v1142 = vpop.permute.xlu0 %1141
    %1145 = vset.pattern.permute.xlu0 0
    %1146 = vperm.xlu0 %1145, %v1004
    %v1147 = vpop.permute.xlu0 %1146
    %1150 = vset.pattern.permute.xlu0 0
    %1151 = vperm.xlu0 %1150, %v1005
    %v1152 = vpop.permute.xlu0 %1151
    %1155 = vset.pattern.permute.xlu0 0
    %1156 = vperm.xlu0 %1155, %v1006
    %v1157 = vpop.permute.xlu0 %1156
    %1160 = vset.pattern.permute.xlu0 0
    %1161 = vperm.xlu0 %1160, %v1007
    %v1162 = vpop.permute.xlu0 %1161
    %1165 = vset.pattern.permute.xlu0 0
    %1166 = vperm.xlu0 %1165, %v1008
    %v1167 = vpop.permute.xlu0 %1166
    %v1201 = vunpack.c.l.b16 %v929
    %v1202 = vunpack.c.h.b16 %v929
    %v1203 = vunpack.c.l.b16 %v930
    %v1204 = vunpack.c.h.b16 %v930
    %v1205 = vunpack.c.l.b16 %v931
    %v1206 = vunpack.c.h.b16 %v931
    %v1207 = vunpack.c.l.b16 %v932
    %v1208 = vunpack.c.h.b16 %v932
    %v1209 = vunpack.c.l.b16 %v933
    %v1210 = vunpack.c.h.b16 %v933
    %v1211 = vunpack.c.l.b16 %v934
    %v1212 = vunpack.c.h.b16 %v934
    %v1213 = vunpack.c.l.b16 %v935
    %v1214 = vunpack.c.h.b16 %v935
    %v1215 = vunpack.c.l.b16 %v936
    %v1216 = vunpack.c.h.b16 %v936
    %v1217 = vunpack.c.l.b16 %v937
    %v1218 = vunpack.c.h.b16 %v937
    %v1219 = vunpack.c.l.b16 %v938
    %v1220 = vunpack.c.h.b16 %v938
    %v1221 = vunpack.c.l.b16 %v939
    %v1222 = vunpack.c.h.b16 %v939
    %v1223 = vunpack.c.l.b16 %v940
    %v1224 = vunpack.c.h.b16 %v940
    %v1225 = vunpack.c.l.b16 %v941
    %v1226 = vunpack.c.h.b16 %v941
    %v1227 = vunpack.c.l.b16 %v942
    %v1228 = vunpack.c.h.b16 %v942
    %v1229 = vunpack.c.l.b16 %v943
    %v1230 = vunpack.c.h.b16 %v943
    %v1231 = vunpack.c.l.b16 %v944
    %v1232 = vunpack.c.h.b16 %v944
    %v1233 = vunpack.c.l.b16 %v945
    %v1234 = vunpack.c.h.b16 %v945
    %v1235 = vunpack.c.l.b16 %v946
    %v1236 = vunpack.c.h.b16 %v946
    %v1237 = vunpack.c.l.b16 %v947
    %v1238 = vunpack.c.h.b16 %v947
    %v1239 = vunpack.c.l.b16 %v948
    %v1240 = vunpack.c.h.b16 %v948
    %v1241 = vunpack.c.l.b16 %v949
    %v1242 = vunpack.c.h.b16 %v949
    %v1243 = vunpack.c.l.b16 %v950
    %v1244 = vunpack.c.h.b16 %v950
    %v1245 = vunpack.c.l.b16 %v951
    %v1246 = vunpack.c.h.b16 %v951
    %v1247 = vunpack.c.l.b16 %v952
    %v1248 = vunpack.c.h.b16 %v952
    %v1249 = vunpack.c.l.b16 %v953
    %v1250 = vunpack.c.h.b16 %v953
    %v1251 = vunpack.c.l.b16 %v954
    %v1252 = vunpack.c.h.b16 %v954
    %v1253 = vunpack.c.l.b16 %v955
    %v1254 = vunpack.c.h.b16 %v955
    %v1255 = vunpack.c.l.b16 %v956
    %v1256 = vunpack.c.h.b16 %v956
    %v1257 = vunpack.c.l.b16 %v957
    %v1258 = vunpack.c.h.b16 %v957
    %v1259 = vunpack.c.l.b16 %v958
    %v1260 = vunpack.c.h.b16 %v958
    %v1261 = vunpack.c.l.b16 %v959
    %v1262 = vunpack.c.h.b16 %v959
    %v1263 = vunpack.c.l.b16 %v960
    %v1264 = vunpack.c.h.b16 %v960
    %v1265 = vpack.c.b16 %v1203, %v1201
    %v1266 = vpack.c.b16 %v1204, %v1202
    %v1267 = vpack.c.b16 %v1207, %v1205
    %v1268 = vpack.c.b16 %v1208, %v1206
    %v1269 = vpack.c.b16 %v1211, %v1209
    %v1270 = vpack.c.b16 %v1212, %v1210
    %v1271 = vpack.c.b16 %v1215, %v1213
    %v1272 = vpack.c.b16 %v1216, %v1214
    %v1273 = vpack.c.b16 %v1219, %v1217
    %v1274 = vpack.c.b16 %v1220, %v1218
    %v1275 = vpack.c.b16 %v1223, %v1221
    %v1276 = vpack.c.b16 %v1224, %v1222
    %v1277 = vpack.c.b16 %v1227, %v1225
    %v1278 = vpack.c.b16 %v1228, %v1226
    %v1279 = vpack.c.b16 %v1231, %v1229
    %v1280 = vpack.c.b16 %v1232, %v1230
    %v1281 = vpack.c.b16 %v1235, %v1233
    %v1282 = vpack.c.b16 %v1236, %v1234
    %v1283 = vpack.c.b16 %v1239, %v1237
    %v1284 = vpack.c.b16 %v1240, %v1238
    %v1285 = vpack.c.b16 %v1243, %v1241
    %v1286 = vpack.c.b16 %v1244, %v1242
    %v1287 = vpack.c.b16 %v1247, %v1245
    %v1288 = vpack.c.b16 %v1248, %v1246
    %v1289 = vpack.c.b16 %v1251, %v1249
    %v1290 = vpack.c.b16 %v1252, %v1250
    %v1291 = vpack.c.b16 %v1255, %v1253
    %v1292 = vpack.c.b16 %v1256, %v1254
    %v1293 = vpack.c.b16 %v1259, %v1257
    %v1294 = vpack.c.b16 %v1260, %v1258
    %v1295 = vpack.c.b16 %v1263, %v1261
    %v1296 = vpack.c.b16 %v1264, %v1262
    %1329 = vmatpush.bf16.msra.mxu0 %v968
    %1330 = vmatpush.bf16.msra.mxu0 %v967
    %1331 = vmatpush.bf16.msra.mxu0 %v966
    %1332 = vmatpush.bf16.msra.mxu0 %v965
    %1333 = vmatpush.bf16.msra.mxu0 %v964
    %1334 = vmatpush.bf16.msra.mxu0 %v963
    %1335 = vmatpush.bf16.msra.mxu0 %v962
    %1336 = vmatpush.bf16.msra.mxu0 %v961
    %1337 = vmatmul.bf16.gmra.mxu0 %v1265
    %v1338 = vpop.f32.mrf.mxu0
    %v1339 = vadd.f32 %v1012, %v1338
    %v1340 = vpop.f32.mrf.mxu0
    %v1341 = vadd.f32 %v1017, %v1340
    %1342 = vmatmul.bf16.gmra.mxu0 %v1267
    %v1343 = vpop.f32.mrf.mxu0
    %v1344 = vadd.f32 %v1022, %v1343
    %v1345 = vpop.f32.mrf.mxu0
    %v1346 = vadd.f32 %v1027, %v1345
    %1347 = vmatmul.bf16.gmra.mxu0 %v1269
    %v1348 = vpop.f32.mrf.mxu0
    %v1349 = vadd.f32 %v1032, %v1348
    %v1350 = vpop.f32.mrf.mxu0
    %v1351 = vadd.f32 %v1037, %v1350
    %1352 = vmatmul.bf16.gmra.mxu0 %v1271
    %v1353 = vpop.f32.mrf.mxu0
    %v1354 = vadd.f32 %v1042, %v1353
    %v1355 = vpop.f32.mrf.mxu0
    %v1356 = vadd.f32 %v1047, %v1355
    %1357 = vmatmul.bf16.gmra.mxu0 %v1273
    %v1358 = vpop.f32.mrf.mxu0
    %v1359 = vadd.f32 %v1052, %v1358
    %v1360 = vpop.f32.mrf.mxu0
    %v1361 = vadd.f32 %v1057, %v1360
    %1362 = vmatmul.bf16.gmra.mxu0 %v1275
    %v1363 = vpop.f32.mrf.mxu0
    %v1364 = vadd.f32 %v1062, %v1363
    %v1365 = vpop.f32.mrf.mxu0
    %v1366 = vadd.f32 %v1067, %v1365
    %1367 = vmatmul.bf16.gmra.mxu0 %v1277
    %v1368 = vpop.f32.mrf.mxu0
    %v1369 = vadd.f32 %v1072, %v1368
    %v1370 = vpop.f32.mrf.mxu0
    %v1371 = vadd.f32 %v1077, %v1370
    %1372 = vmatmul.bf16.gmra.mxu0 %v1279
    %v1373 = vpop.f32.mrf.mxu0
    %v1374 = vadd.f32 %v1082, %v1373
    %v1375 = vpop.f32.mrf.mxu0
    %v1376 = vadd.f32 %v1087, %v1375
    %1377 = vmatmul.bf16.gmra.mxu0 %v1281
    %v1378 = vpop.f32.mrf.mxu0
    %v1379 = vadd.f32 %v1092, %v1378
    %v1380 = vpop.f32.mrf.mxu0
    %v1381 = vadd.f32 %v1097, %v1380
    %1382 = vmatmul.bf16.gmra.mxu0 %v1283
    %v1383 = vpop.f32.mrf.mxu0
    %v1384 = vadd.f32 %v1102, %v1383
    %v1385 = vpop.f32.mrf.mxu0
    %v1386 = vadd.f32 %v1107, %v1385
    %1387 = vmatmul.bf16.gmra.mxu0 %v1285
    %v1388 = vpop.f32.mrf.mxu0
    %v1389 = vadd.f32 %v1112, %v1388
    %v1390 = vpop.f32.mrf.mxu0
    %v1391 = vadd.f32 %v1117, %v1390
    %1392 = vmatmul.bf16.gmra.mxu0 %v1287
    %v1393 = vpop.f32.mrf.mxu0
    %v1394 = vadd.f32 %v1122, %v1393
    %v1395 = vpop.f32.mrf.mxu0
    %v1396 = vadd.f32 %v1127, %v1395
    %1397 = vmatmul.bf16.gmra.mxu0 %v1289
    %v1398 = vpop.f32.mrf.mxu0
    %v1399 = vadd.f32 %v1132, %v1398
    %v1400 = vpop.f32.mrf.mxu0
    %v1401 = vadd.f32 %v1137, %v1400
    %1402 = vmatmul.bf16.gmra.mxu0 %v1291
    %v1403 = vpop.f32.mrf.mxu0
    %v1404 = vadd.f32 %v1142, %v1403
    %v1405 = vpop.f32.mrf.mxu0
    %v1406 = vadd.f32 %v1147, %v1405
    %1407 = vmatmul.bf16.gmra.mxu0 %v1293
    %v1408 = vpop.f32.mrf.mxu0
    %v1409 = vadd.f32 %v1152, %v1408
    %v1410 = vpop.f32.mrf.mxu0
    %v1411 = vadd.f32 %v1157, %v1410
    %1412 = vmatmul.bf16.gmra.mxu0 %v1295
    %v1413 = vpop.f32.mrf.mxu0
    %v1414 = vadd.f32 %v1162, %v1413
    %v1415 = vpop.f32.mrf.mxu0
    %v1416 = vadd.f32 %v1167, %v1415
    %1417 = vdwg.mxu0
    %1418 = vmatpush.bf16.msra.mxu0 %v976
    %1419 = vmatpush.bf16.msra.mxu0 %v975
    %1420 = vmatpush.bf16.msra.mxu0 %v974
    %1421 = vmatpush.bf16.msra.mxu0 %v973
    %1422 = vmatpush.bf16.msra.mxu0 %v972
    %1423 = vmatpush.bf16.msra.mxu0 %v971
    %1424 = vmatpush.bf16.msra.mxu0 %v970
    %1425 = vmatpush.bf16.msra.mxu0 %v969
    %1426 = vmatmul.bf16.gmra.mxu0 %v1266
    %v1427 = vpop.f32.mrf.mxu0
    %v1428 = vadd.f32 %v1339, %v1427
    %v1429 = vpop.f32.mrf.mxu0
    %v1430 = vadd.f32 %v1341, %v1429
    %1431 = vmatmul.bf16.gmra.mxu0 %v1268
    %v1432 = vpop.f32.mrf.mxu0
    %v1433 = vadd.f32 %v1344, %v1432
    %v1434 = vpop.f32.mrf.mxu0
    %v1435 = vadd.f32 %v1346, %v1434
    %1436 = vmatmul.bf16.gmra.mxu0 %v1270
    %v1437 = vpop.f32.mrf.mxu0
    %v1438 = vadd.f32 %v1349, %v1437
    %v1439 = vpop.f32.mrf.mxu0
    %v1440 = vadd.f32 %v1351, %v1439
    %1441 = vmatmul.bf16.gmra.mxu0 %v1272
    %v1442 = vpop.f32.mrf.mxu0
    %v1443 = vadd.f32 %v1354, %v1442
    %v1444 = vpop.f32.mrf.mxu0
    %v1445 = vadd.f32 %v1356, %v1444
    %1446 = vmatmul.bf16.gmra.mxu0 %v1274
    %v1447 = vpop.f32.mrf.mxu0
    %v1448 = vadd.f32 %v1359, %v1447
    %v1449 = vpop.f32.mrf.mxu0
    %v1450 = vadd.f32 %v1361, %v1449
    %1451 = vmatmul.bf16.gmra.mxu0 %v1276
    %v1452 = vpop.f32.mrf.mxu0
    %v1453 = vadd.f32 %v1364, %v1452
    %v1454 = vpop.f32.mrf.mxu0
    %v1455 = vadd.f32 %v1366, %v1454
    %1456 = vmatmul.bf16.gmra.mxu0 %v1278
    %v1457 = vpop.f32.mrf.mxu0
    %v1458 = vadd.f32 %v1369, %v1457
    %v1459 = vpop.f32.mrf.mxu0
    %v1460 = vadd.f32 %v1371, %v1459
    %1461 = vmatmul.bf16.gmra.mxu0 %v1280
    %v1462 = vpop.f32.mrf.mxu0
    %v1463 = vadd.f32 %v1374, %v1462
    %v1464 = vpop.f32.mrf.mxu0
    %v1465 = vadd.f32 %v1376, %v1464
    %1466 = vmatmul.bf16.gmra.mxu0 %v1282
    %v1467 = vpop.f32.mrf.mxu0
    %v1468 = vadd.f32 %v1379, %v1467
    %v1469 = vpop.f32.mrf.mxu0
    %v1470 = vadd.f32 %v1381, %v1469
    %1471 = vmatmul.bf16.gmra.mxu0 %v1284
    %v1472 = vpop.f32.mrf.mxu0
    %v1473 = vadd.f32 %v1384, %v1472
    %v1474 = vpop.f32.mrf.mxu0
    %v1475 = vadd.f32 %v1386, %v1474
    %1476 = vmatmul.bf16.gmra.mxu0 %v1286
    %v1477 = vpop.f32.mrf.mxu0
    %v1478 = vadd.f32 %v1389, %v1477
    %v1479 = vpop.f32.mrf.mxu0
    %v1480 = vadd.f32 %v1391, %v1479
    %1481 = vmatmul.bf16.gmra.mxu0 %v1288
    %v1482 = vpop.f32.mrf.mxu0
    %v1483 = vadd.f32 %v1394, %v1482
    %v1484 = vpop.f32.mrf.mxu0
    %v1485 = vadd.f32 %v1396, %v1484
    %1486 = vmatmul.bf16.gmra.mxu0 %v1290
    %v1487 = vpop.f32.mrf.mxu0
    %v1488 = vadd.f32 %v1399, %v1487
    %v1489 = vpop.f32.mrf.mxu0
    %v1490 = vadd.f32 %v1401, %v1489
    %1491 = vmatmul.bf16.gmra.mxu0 %v1292
    %v1492 = vpop.f32.mrf.mxu0
    %v1493 = vadd.f32 %v1404, %v1492
    %v1494 = vpop.f32.mrf.mxu0
    %v1495 = vadd.f32 %v1406, %v1494
    %1496 = vmatmul.bf16.gmra.mxu0 %v1294
    %v1497 = vpop.f32.mrf.mxu0
    %v1498 = vadd.f32 %v1409, %v1497
    %v1499 = vpop.f32.mrf.mxu0
    %v1500 = vadd.f32 %v1411, %v1499
    %1501 = vmatmul.bf16.gmra.mxu0 %v1296
    %v1502 = vpop.f32.mrf.mxu0
    %v1503 = vadd.f32 %v1414, %v1502
    %v1504 = vpop.f32.mrf.mxu0
    %v1505 = vadd.f32 %v1416, %v1504
    %1506 = vdwg.mxu0
    %v1507 = vmul.f32 %v1428, 0.01
    %v1508 = vmul.f32 %v1430, 0.01
    %v1509 = vmul.f32 %v1433, 0.01
    %v1510 = vmul.f32 %v1435, 0.01
    %v1511 = vmul.f32 %v1438, 0.01
    %v1512 = vmul.f32 %v1440, 0.01
    %v1513 = vmul.f32 %v1443, 0.01
    %v1514 = vmul.f32 %v1445, 0.01
    %v1515 = vmul.f32 %v1448, 0.01
    %v1516 = vmul.f32 %v1450, 0.01
    %v1517 = vmul.f32 %v1453, 0.01
    %v1518 = vmul.f32 %v1455, 0.01
    %v1519 = vmul.f32 %v1458, 0.01
    %v1520 = vmul.f32 %v1460, 0.01
    %v1521 = vmul.f32 %v1463, 0.01
    %v1522 = vmul.f32 %v1465, 0.01
    %v1523 = vmul.f32 %v1468, 0.01
    %v1524 = vmul.f32 %v1470, 0.01
    %v1525 = vmul.f32 %v1473, 0.01
    %v1526 = vmul.f32 %v1475, 0.01
    %v1527 = vmul.f32 %v1478, 0.01
    %v1528 = vmul.f32 %v1480, 0.01
    %v1529 = vmul.f32 %v1483, 0.01
    %v1530 = vmul.f32 %v1485, 0.01
    %v1531 = vmul.f32 %v1488, 0.01
    %v1532 = vmul.f32 %v1490, 0.01
    %v1533 = vmul.f32 %v1493, 0.01
    %v1534 = vmul.f32 %v1495, 0.01
    %v1535 = vmul.f32 %v1498, 0.01
    %v1536 = vmul.f32 %v1500, 0.01
    %v1537 = vmul.f32 %v1503, 0.01
    %v1538 = vmul.f32 %v1505, 0.01
    %v1539 = vmax.f32 %v1428, %v1507
    %v1540 = vmax.f32 %v1430, %v1508
    %v1541 = vmax.f32 %v1433, %v1509
    %v1542 = vmax.f32 %v1435, %v1510
    %v1543 = vmax.f32 %v1438, %v1511
    %v1544 = vmax.f32 %v1440, %v1512
    %v1545 = vmax.f32 %v1443, %v1513
    %v1546 = vmax.f32 %v1445, %v1514
    %v1547 = vmax.f32 %v1448, %v1515
    %v1548 = vmax.f32 %v1450, %v1516
    %v1549 = vmax.f32 %v1453, %v1517
    %v1550 = vmax.f32 %v1455, %v1518
    %v1551 = vmax.f32 %v1458, %v1519
    %v1552 = vmax.f32 %v1460, %v1520
    %v1553 = vmax.f32 %v1463, %v1521
    %v1554 = vmax.f32 %v1465, %v1522
    %v1555 = vmax.f32 %v1468, %v1523
    %v1556 = vmax.f32 %v1470, %v1524
    %v1557 = vmax.f32 %v1473, %v1525
    %v1558 = vmax.f32 %v1475, %v1526
    %v1559 = vmax.f32 %v1478, %v1527
    %v1560 = vmax.f32 %v1480, %v1528
    %v1561 = vmax.f32 %v1483, %v1529
    %v1562 = vmax.f32 %v1485, %v1530
    %v1563 = vmax.f32 %v1488, %v1531
    %v1564 = vmax.f32 %v1490, %v1532
    %v1565 = vmax.f32 %v1493, %v1533
    %v1566 = vmax.f32 %v1495, %v1534
    %v1567 = vmax.f32 %v1498, %v1535
    %v1568 = vmax.f32 %v1500, %v1536
    %v1569 = vmax.f32 %v1503, %v1537
    %v1570 = vmax.f32 %v1505, %v1538
    %v1571 = vld [vmem:[%s5] sm:$0xff]
    %v1572 = vld [vmem:[%s5 + $0x8] sm:$0xff]
    %v1573 = vld [vmem:[%s5 + $0x10] sm:$0xff]
    %v1574 = vld [vmem:[%s5 + $0x18] sm:$0xff]
    %v1575 = vld [vmem:[%s5 + $0x20] sm:$0xff]
    %v1576 = vld [vmem:[%s5 + $0x28] sm:$0xff]
    %v1577 = vld [vmem:[%s5 + $0x30] sm:$0xff]
    %v1578 = vld [vmem:[%s5 + $0x38] sm:$0xff]
    %v1579 = vld [vmem:[%s5 + $0x40] sm:$0xff]
    %v1580 = vld [vmem:[%s5 + $0x48] sm:$0xff]
    %v1581 = vld [vmem:[%s5 + $0x50] sm:$0xff]
    %v1582 = vld [vmem:[%s5 + $0x58] sm:$0xff]
    %v1583 = vld [vmem:[%s5 + $0x60] sm:$0xff]
    %v1584 = vld [vmem:[%s5 + $0x68] sm:$0xff]
    %v1585 = vld [vmem:[%s5 + $0x70] sm:$0xff]
    %v1586 = vld [vmem:[%s5 + $0x78] sm:$0xff]
    %v1587 = vld [vmem:[%s5 + $0x80] sm:$0xff]
    %v1588 = vld [vmem:[%s5 + $0x88] sm:$0xff]
    %v1589 = vld [vmem:[%s5 + $0x90] sm:$0xff]
    %v1590 = vld [vmem:[%s5 + $0x98] sm:$0xff]
    %v1591 = vld [vmem:[%s5 + $0xa0] sm:$0xff]
    %v1592 = vld [vmem:[%s5 + $0xa8] sm:$0xff]
    %v1593 = vld [vmem:[%s5 + $0xb0] sm:$0xff]
    %v1594 = vld [vmem:[%s5 + $0xb8] sm:$0xff]
    %v1595 = vld [vmem:[%s5 + $0xc0] sm:$0xff]
    %v1596 = vld [vmem:[%s5 + $0xc8] sm:$0xff]
    %v1597 = vld [vmem:[%s5 + $0xd0] sm:$0xff]
    %v1598 = vld [vmem:[%s5 + $0xd8] sm:$0xff]
    %v1599 = vld [vmem:[%s5 + $0xe0] sm:$0xff]
    %v1600 = vld [vmem:[%s5 + $0xe8] sm:$0xff]
    %v1601 = vld [vmem:[%s5 + $0xf0] sm:$0xff]
    %v1602 = vld [vmem:[%s5 + $0xf8] sm:$0xff]
    %1604 = vset.pattern.permute.xlu0 0
    %1605 = vperm.xlu0 %1604, %v1571
    %v1606 = vpop.permute.xlu0 %1605
    %1609 = vset.pattern.permute.xlu0 0
    %1610 = vperm.xlu0 %1609, %v1572
    %v1611 = vpop.permute.xlu0 %1610
    %1614 = vset.pattern.permute.xlu0 0
    %1615 = vperm.xlu0 %1614, %v1573
    %v1616 = vpop.permute.xlu0 %1615
    %1619 = vset.pattern.permute.xlu0 0
    %1620 = vperm.xlu0 %1619, %v1574
    %v1621 = vpop.permute.xlu0 %1620
    %1624 = vset.pattern.permute.xlu0 0
    %1625 = vperm.xlu0 %1624, %v1575
    %v1626 = vpop.permute.xlu0 %1625
    %1629 = vset.pattern.permute.xlu0 0
    %1630 = vperm.xlu0 %1629, %v1576
    %v1631 = vpop.permute.xlu0 %1630
    %1634 = vset.pattern.permute.xlu0 0
    %1635 = vperm.xlu0 %1634, %v1577
    %v1636 = vpop.permute.xlu0 %1635
    %1639 = vset.pattern.permute.xlu0 0
    %1640 = vperm.xlu0 %1639, %v1578
    %v1641 = vpop.permute.xlu0 %1640
    %1644 = vset.pattern.permute.xlu0 0
    %1645 = vperm.xlu0 %1644, %v1579
    %v1646 = vpop.permute.xlu0 %1645
    %1649 = vset.pattern.permute.xlu0 0
    %1650 = vperm.xlu0 %1649, %v1580
    %v1651 = vpop.permute.xlu0 %1650
    %1654 = vset.pattern.permute.xlu0 0
    %1655 = vperm.xlu0 %1654, %v1581
    %v1656 = vpop.permute.xlu0 %1655
    %1659 = vset.pattern.permute.xlu0 0
    %1660 = vperm.xlu0 %1659, %v1582
    %v1661 = vpop.permute.xlu0 %1660
    %1664 = vset.pattern.permute.xlu0 0
    %1665 = vperm.xlu0 %1664, %v1583
    %v1666 = vpop.permute.xlu0 %1665
    %1669 = vset.pattern.permute.xlu0 0
    %1670 = vperm.xlu0 %1669, %v1584
    %v1671 = vpop.permute.xlu0 %1670
    %1674 = vset.pattern.permute.xlu0 0
    %1675 = vperm.xlu0 %1674, %v1585
    %v1676 = vpop.permute.xlu0 %1675
    %1679 = vset.pattern.permute.xlu0 0
    %1680 = vperm.xlu0 %1679, %v1586
    %v1681 = vpop.permute.xlu0 %1680
    %1684 = vset.pattern.permute.xlu0 0
    %1685 = vperm.xlu0 %1684, %v1587
    %v1686 = vpop.permute.xlu0 %1685
    %1689 = vset.pattern.permute.xlu0 0
    %1690 = vperm.xlu0 %1689, %v1588
    %v1691 = vpop.permute.xlu0 %1690
    %1694 = vset.pattern.permute.xlu0 0
    %1695 = vperm.xlu0 %1694, %v1589
    %v1696 = vpop.permute.xlu0 %1695
    %1699 = vset.pattern.permute.xlu0 0
    %1700 = vperm.xlu0 %1699, %v1590
    %v1701 = vpop.permute.xlu0 %1700
    %1704 = vset.pattern.permute.xlu0 0
    %1705 = vperm.xlu0 %1704, %v1591
    %v1706 = vpop.permute.xlu0 %1705
    %1709 = vset.pattern.permute.xlu0 0
    %1710 = vperm.xlu0 %1709, %v1592
    %v1711 = vpop.permute.xlu0 %1710
    %1714 = vset.pattern.permute.xlu0 0
    %1715 = vperm.xlu0 %1714, %v1593
    %v1716 = vpop.permute.xlu0 %1715
    %1719 = vset.pattern.permute.xlu0 0
    %1720 = vperm.xlu0 %1719, %v1594
    %v1721 = vpop.permute.xlu0 %1720
    %1724 = vset.pattern.permute.xlu0 0
    %1725 = vperm.xlu0 %1724, %v1595
    %v1726 = vpop.permute.xlu0 %1725
    %1729 = vset.pattern.permute.xlu0 0
    %1730 = vperm.xlu0 %1729, %v1596
    %v1731 = vpop.permute.xlu0 %1730
    %1734 = vset.pattern.permute.xlu0 0
    %1735 = vperm.xlu0 %1734, %v1597
    %v1736 = vpop.permute.xlu0 %1735
    %1739 = vset.pattern.permute.xlu0 0
    %1740 = vperm.xlu0 %1739, %v1598
    %v1741 = vpop.permute.xlu0 %1740
    %1744 = vset.pattern.permute.xlu0 0
    %1745 = vperm.xlu0 %1744, %v1599
    %v1746 = vpop.permute.xlu0 %1745
    %1749 = vset.pattern.permute.xlu0 0
    %1750 = vperm.xlu0 %1749, %v1600
    %v1751 = vpop.permute.xlu0 %1750
    %1754 = vset.pattern.permute.xlu0 0
    %1755 = vperm.xlu0 %1754, %v1601
    %v1756 = vpop.permute.xlu0 %1755
    %1759 = vset.pattern.permute.xlu0 0
    %1760 = vperm.xlu0 %1759, %v1602
    %v1761 = vpop.permute.xlu0 %1760
    %v1763 = vmul.f32 %v1539, %v1606
    %v1764 = vmul.f32 %v1540, %v1611
    %v1765 = vmul.f32 %v1541, %v1616
    %v1766 = vmul.f32 %v1542, %v1621
    %v1767 = vmul.f32 %v1543, %v1626
    %v1768 = vmul.f32 %v1544, %v1631
    %v1769 = vmul.f32 %v1545, %v1636
    %v1770 = vmul.f32 %v1546, %v1641
    %v1771 = vmul.f32 %v1547, %v1646
    %v1772 = vmul.f32 %v1548, %v1651
    %v1773 = vmul.f32 %v1549, %v1656
    %v1774 = vmul.f32 %v1550, %v1661
    %v1775 = vmul.f32 %v1551, %v1666
    %v1776 = vmul.f32 %v1552, %v1671
    %v1777 = vmul.f32 %v1553, %v1676
    %v1778 = vmul.f32 %v1554, %v1681
    %v1779 = vmul.f32 %v1555, %v1686
    %v1780 = vmul.f32 %v1556, %v1691
    %v1781 = vmul.f32 %v1557, %v1696
    %v1782 = vmul.f32 %v1558, %v1701
    %v1783 = vmul.f32 %v1559, %v1706
    %v1784 = vmul.f32 %v1560, %v1711
    %v1785 = vmul.f32 %v1561, %v1716
    %v1786 = vmul.f32 %v1562, %v1721
    %v1787 = vmul.f32 %v1563, %v1726
    %v1788 = vmul.f32 %v1564, %v1731
    %v1789 = vmul.f32 %v1565, %v1736
    %v1790 = vmul.f32 %v1566, %v1741
    %v1791 = vmul.f32 %v1567, %v1746
    %v1792 = vmul.f32 %v1568, %v1751
    %v1793 = vmul.f32 %v1569, %v1756
    %v1794 = vmul.f32 %v1570, %v1761
    %vm1795 = vcmask 64512
    %v1796 = vsel %vm1795, %v1763, 0.0
    %v1797 = vsel %vm1795, %v1764, 0.0
    %v1798 = vadd.f32 %v1796, %v1797
    %v1799 = vsel %vm1795, %v1765, 0.0
    %v1800 = vadd.f32 %v1798, %v1799
    %v1801 = vsel %vm1795, %v1766, 0.0
    %v1802 = vadd.f32 %v1800, %v1801
    %v1803 = vsel %vm1795, %v1767, 0.0
    %v1804 = vadd.f32 %v1802, %v1803
    %v1805 = vsel %vm1795, %v1768, 0.0
    %v1806 = vadd.f32 %v1804, %v1805
    %v1807 = vsel %vm1795, %v1769, 0.0
    %v1808 = vadd.f32 %v1806, %v1807
    %v1809 = vsel %vm1795, %v1770, 0.0
    %v1810 = vadd.f32 %v1808, %v1809
    %v1811 = vsel %vm1795, %v1771, 0.0
    %v1812 = vadd.f32 %v1810, %v1811
    %v1813 = vsel %vm1795, %v1772, 0.0
    %v1814 = vadd.f32 %v1812, %v1813
    %v1815 = vsel %vm1795, %v1773, 0.0
    %v1816 = vadd.f32 %v1814, %v1815
    %v1817 = vsel %vm1795, %v1774, 0.0
    %v1818 = vadd.f32 %v1816, %v1817
    %v1819 = vsel %vm1795, %v1775, 0.0
    %v1820 = vadd.f32 %v1818, %v1819
    %v1821 = vsel %vm1795, %v1776, 0.0
    %v1822 = vadd.f32 %v1820, %v1821
    %v1823 = vsel %vm1795, %v1777, 0.0
    %v1824 = vadd.f32 %v1822, %v1823
    %v1825 = vsel %vm1795, %v1778, 0.0
    %v1826 = vadd.f32 %v1824, %v1825
    %v1827 = vsel %vm1795, %v1779, 0.0
    %v1828 = vadd.f32 %v1826, %v1827
    %v1829 = vsel %vm1795, %v1780, 0.0
    %v1830 = vadd.f32 %v1828, %v1829
    %v1831 = vsel %vm1795, %v1781, 0.0
    %v1832 = vadd.f32 %v1830, %v1831
    %v1833 = vsel %vm1795, %v1782, 0.0
    %v1834 = vadd.f32 %v1832, %v1833
    %v1835 = vsel %vm1795, %v1783, 0.0
    %v1836 = vadd.f32 %v1834, %v1835
    %v1837 = vsel %vm1795, %v1784, 0.0
    %v1838 = vadd.f32 %v1836, %v1837
    %v1839 = vsel %vm1795, %v1785, 0.0
    %v1840 = vadd.f32 %v1838, %v1839
    %v1841 = vsel %vm1795, %v1786, 0.0
    %v1842 = vadd.f32 %v1840, %v1841
    %v1843 = vsel %vm1795, %v1787, 0.0
    %v1844 = vadd.f32 %v1842, %v1843
    %v1845 = vsel %vm1795, %v1788, 0.0
    %v1846 = vadd.f32 %v1844, %v1845
    %v1847 = vsel %vm1795, %v1789, 0.0
    %v1848 = vadd.f32 %v1846, %v1847
    %v1849 = vsel %vm1795, %v1790, 0.0
    %v1850 = vadd.f32 %v1848, %v1849
    %v1851 = vsel %vm1795, %v1791, 0.0
    %v1852 = vadd.f32 %v1850, %v1851
    %v1853 = vsel %vm1795, %v1792, 0.0
    %v1854 = vadd.f32 %v1852, %v1853
    %v1855 = vsel %vm1795, %v1793, 0.0
    %v1856 = vadd.f32 %v1854, %v1855
    %v1857 = vsel %vm1795, %v1794, 0.0
    %v1858 = vadd.f32 %v1856, %v1857
    %v1859 = vrot.slane %v1858, 4
    %v1860 = vadd.f32 %v1858, %v1859
    %v1861 = vrot.slane %v1860, 2
    %v1862 = vadd.f32 %v1860, %v1861
    %v1863 = vrot.slane %v1862, 1
    %v1864 = vadd.f32 %v1862, %v1863
    %v1865 = vld [vmem:[#allocation2] sm:$0x1]
    %1867 = vset.pattern.permute.xlu0 0
    %1868 = vperm.xlu0 %1867, %v1865
    %v1869 = vpop.permute.xlu0 %1868
    %v1871 = vperm.slane %v1869, 0
    %v1872 = vadd.f32 %v1864, %v1871
    %vm1873 = vcmask 57344
    %1874 = vst.msk [vmem:[#allocation3] sm:$0x1] %vm1873, %v1872
    // Predicated region
    $region30: #{tpu_custom_call.1} parent=1 // pred_check
      _
    $region31: #{tpu_custom_call.1} parent=1 // pred_check_branch
      %1876 = sbr.rel (0) target = $region33
    $region32: #{tpu_custom_call.1} parent=1 // pred_region
      %1878 = vsyncadd [#allocation4], 0
      %s1880 = sshll.u32 [#allocation3], 4
      %s1881 = int_to_ptr.vmem [resolvable:$true] %s1880
      %s1882 = sshll.u32 %s7, 4
      %s1883 = int_to_ptr.hbm [resolvable:$true] %s1882
      %1885 = dma.vmem_to_hbm [thread:$0]  %s1881, 16, %s1883, [#allocation4]
    $region33: #{tpu_custom_call.1} parent=1 // pred_fallthru
      _
    // Predicated region
    $region34: #{tpu_custom_call.1} parent=1 // pred_check
      _
    $region35: #{tpu_custom_call.1} parent=1 // pred_check_branch
      %1887 = sbr.rel (0) target = $region37
    $region36: #{tpu_custom_call.1} parent=1 // pred_region
      %1889 = dma.done [#allocation4], 16
    $region37: #{tpu_custom_call.1} parent=1 // pred_fallthru
      _
    %1890 = vsyncpa [#allocation4], 1

</llo_original>
